<compile_context>
chip_gen: v5e
topology: v5e:2x2
jax: 0.10.0
libtpu: 0.0.40
codegen_flags: <defaults>
</compile_context>

<pallas_src>
import functools

import jax
import jax.numpy as jnp
from jax.experimental import pallas as pl
from jax.experimental.pallas import tpu as pltpu

LEAKY_SLOPE = 0.01              # nn.LeakyReLU() default negative_slope
LANE = 128
SUBLANE = 8
VMEM_CAP_BYTES = 48 * 1024 * 1024   # conservative vs v7x's 64 MiB/TC (headroom for
                                    # compiler scratch / semaphores / double buffers)


def _round_up(n, m):
    return ((n + m - 1) // m) * m


def _make_decoder_kernel(num_linear: int, mxu_dtype):
    """Kernel for: Linear0, (LeakyReLU, Linear_i)*, Tanh, norm-rescale (one batch tile)."""

    def kernel(*refs):
        # refs = x, (w0, b0), ..., (w_{L-1}, b_{L-1}), target_norm, out
        x_ref = refs[0]
        norm_ref = refs[1 + 2 * num_linear]
        out_ref = refs[2 + 2 * num_linear]

        h = x_ref[...].astype(jnp.float32)
        for i in range(num_linear):
            if i > 0:
                # LeakyReLU (slope in [0,1)): max(h, a*h) — mul + max on the VPU
                h = jnp.maximum(h, LEAKY_SLOPE * h)
            w = refs[1 + 2 * i][...]                      # stored in mxu_dtype
            b = refs[2 + 2 * i][...].astype(jnp.float32)
            # MXU matmul: mxu_dtype inputs (activations re-cast each layer), f32 acc
            h = jnp.dot(h.astype(mxu_dtype), w,
                        preferred_element_type=jnp.float32) + b

        # final activation
        h = jnp.tanh(h)

        # torch: input / (||input||_2(dim=-1) / org_norm[ids]).unsqueeze(-1)
        #      = input * org_norm[ids] * rsqrt(sum(input^2))
        # No eps — matches torch divide-by-zero semantics (an all-zero tanh row -> NaN;
        # out-of-range rows of a partial last tile may compute NaN and are discarded).
        sq = jnp.sum(h * h, axis=-1, keepdims=True)
        scale = norm_ref[...].astype(jnp.float32) * jax.lax.rsqrt(sq)
        out_ref[...] = (h * scale).astype(out_ref.dtype)

    return kernel


@functools.partial(jax.jit,
                   static_argnames=("out_dim", "tile_b", "mxu_dtype", "out_dtype"))
def nonlinear_decoder_forward(x, weights, biases, org_norm, ids, *,
                              out_dim, tile_b=1024,
                              mxu_dtype=jnp.bfloat16, out_dtype=jnp.float32):
    """x: (B, latent) f32; weights[i]: (in_i, out_i) pre-transposed; biases[i]: (1, out_i);
    org_norm: (N,) f32; ids: (B,) int32.  Returns (B, out_dim) out_dtype."""
    B, latent = x.shape
    num_linear = len(weights)

    # glue: gather per-row target norms (org_norm[ids]) outside the kernel.
    # TODO(synk): could fold this into the kernel via PrefetchScalarGridSpec (ids in
    # SMEM) to drop the (B,1) stream entirely for very large B.
    target_norm = jnp.take(org_norm, ids, axis=0).reshape(B, 1).astype(jnp.float32)

    # ---- feature-dim padding ----
    # x stays UNPADDED in HBM (block last dim == full array dim -> (8,128) rule OK;
    # the MXU simply takes K=latent). Hidden and output dims are zero-padded to
    # lane-dense multiples of 128 (mathematically a no-op) so bias adds, activations
    # and the final store are unmasked; the output is sliced back in the wrapper.
    sizes = [latent] + [w.shape[1] for w in weights]
    assert sizes[-1] == out_dim
    padded = [latent] + [_round_up(s, LANE) for s in sizes[1:]]
    padded_out = padded[-1]

    ws, bs = [], []
    for i, (w, b) in enumerate(zip(weights, biases)):
        w_p = jnp.pad(w, ((0, padded[i] - sizes[i]),
                          (0, padded[i + 1] - sizes[i + 1])))
        b_p = jnp.pad(b.reshape(1, -1), ((0, 0), (0, padded[i + 1] - sizes[i + 1])))
        ws.append(w_p.astype(mxu_dtype))        # bf16 default halves resident weight VMEM
        bs.append(b_p.astype(jnp.float32))      # bias added in f32 on the VPU

    # ---- batch tiling: large tiles (HBM-streaming-bound), but always >=2 and an
    # even number of grid steps so v7x's 2 TensorCores both get work ----
    n_tiles = max(2, pl.cdiv(B, tile_b))
    if n_tiles % 2:
        n_tiles += 1
    tb = max(SUBLANE, _round_up(pl.cdiv(B, n_tiles), SUBLANE))

    # ---- VMEM budget: resident params + double-buffered streamed tiles + live acts
    mxu_itemsize = jnp.dtype(mxu_dtype).itemsize      # works for int dtypes too
    out_itemsize = jnp.dtype(out_dtype).itemsize
    w_bytes = sum(padded[i] * padded[i + 1] for i in range(num_linear)) * mxu_itemsize
    b_bytes = sum(padded[1:]) * 4

    def _io_act_bytes(t):
        io = 2 * t * (latent * 4 + 4 + padded_out * out_itemsize)   # x/norm/out, dbl-buf
        act = 3 * t * max(padded) * 4                               # live f32 intermediates
        return io + act

    # fallback: shrink the batch tile until everything fits the conservative cap
    while tb > SUBLANE and w_bytes + b_bytes + _io_act_bytes(tb) > VMEM_CAP_BYTES:
        tb = max(SUBLANE, _round_up(tb // 2, SUBLANE))
    # TODO(synk): if the resident weights alone exceed the cap, switch to a
    # layer-streamed weight pipeline instead of constant-index VMEM residency.

    grid = (pl.cdiv(B, tb),)
    vmem_limit = int(min(max(2 * (w_bytes + b_bytes + _io_act_bytes(tb)),
                             16 * 1024 * 1024),
                         VMEM_CAP_BYTES))

    # ---- operands & specs ----
    operands = [x]
    in_specs = [pl.BlockSpec((tb, latent), lambda i: (i, 0))]        # streamed, unpadded
    for k in range(num_linear):
        operands += [ws[k], bs[k]]
        in_specs += [pl.BlockSpec(ws[k].shape, lambda i: (0, 0)),    # VMEM-resident
                     pl.BlockSpec(bs[k].shape, lambda i: (0, 0))]    # VMEM-resident
    operands.append(target_norm)
    in_specs.append(pl.BlockSpec((tb, 1), lambda i: (i, 0)))         # streamed (tb,1)

    out_specs = pl.BlockSpec((tb, padded_out), lambda i: (i, 0))     # lane-dense store

    kernel = _make_decoder_kernel(num_linear, mxu_dtype)

    # TODO(synk): if v7x profiling shows exposed DMA at these tile sizes, set
    # pipeline_mode=pl.Buffered(3) on the streamed x/out BlockSpecs.
    out = pl.pallas_call(
        kernel,
        out_shape=jax.ShapeDtypeStruct((B, padded_out), out_dtype),
        grid_spec=pltpu.PrefetchScalarGridSpec(
            num_scalar_prefetch=0,
            grid=grid,
            in_specs=in_specs,
            out_specs=out_specs,
        ),
        compiler_params=pltpu.CompilerParams(
            dimension_semantics=("parallel",),   # batch tiles shard over v7x's 2 TCs
            vmem_limit_bytes=vmem_limit,
        ),
    )(*operands)

    if padded_out != out_dim:
        out = out[:, :out_dim]
    return out


def _init_linear(key, in_f, out_f):
    """Deterministic init mimicking nn.Linear's uniform(-1/sqrt(in), 1/sqrt(in))."""
    kw, kb = jax.random.split(key)
    bound = 1.0 / jnp.sqrt(jnp.float32(in_f))
    # stored as (in_features, out_features) — already transposed for h @ W
    w = jax.random.uniform(kw, (in_f, out_f), jnp.float32, -bound, bound)
    b = jax.random.uniform(kb, (1, out_f), jnp.float32, -bound, bound)
    return w, b


def _reference_forward(x, weights, biases, org_norm, ids):
    h = x
    for i, (w, b) in enumerate(zip(weights, biases)):
        if i > 0:
            h = jnp.where(h > 0, h, LEAKY_SLOPE * h)
        h = h @ w + b
    h = jnp.tanh(h)
    n = jnp.linalg.norm(h, axis=-1, keepdims=True)
    return h * (org_norm[ids][:, None] / n)


if __name__ == "__main__":
    # Small, module-consistent shapes (batch big enough to exercise 2 grid tiles).
    batch = 512
    latent_dim = 32
    dec_layer_sizes = [64, 128]
    out_dim = 256
    num_items = 16  # size of org_norm table

    key = jax.random.PRNGKey(0)
    k_x, k_ids, k_norm, k_params = jax.random.split(key, 4)

    # Layer size chain: latent_dim -> 64 -> 128 -> out_dim
    sizes = [latent_dim] + dec_layer_sizes + [out_dim]
    weights, biases = [], []
    pkeys = jax.random.split(k_params, len(sizes) - 1)
    for i in range(len(sizes) - 1):
        w, b = _init_linear(pkeys[i], sizes[i], sizes[i + 1])
        weights.append(w)
        biases.append(b)

    x = jax.random.normal(k_x, (batch, latent_dim), jnp.float32)
    ids = jax.random.randint(k_ids, (batch,), 0, num_items, jnp.int32)
    org_norm = jax.random.uniform(k_norm, (num_items,), jnp.float32, 0.5, 2.0)

    ref = _reference_forward(x, weights, biases, org_norm, ids)

    # f32 MXU-input path — validation only (on v6e/v7x the MXU still decomposes this
    # into multi-pass bf16, so "close to" — not bitwise — a true fp32 GEMM).
    out_f32 = nonlinear_decoder_forward(
        x, tuple(weights), tuple(biases), org_norm, ids,
        out_dim=out_dim, mxu_dtype=jnp.float32)
    out_f32 = jax.block_until_ready(out_f32)
    assert out_f32.shape == (batch, out_dim)
    assert jnp.allclose(out_f32, ref, atol=1e-4, rtol=1e-4), "f32 path mismatch vs reference"

    # Production default: bf16 MXU inputs (weights AND per-layer activations) with f32
    # accumulation — the native MXU fast path on v5e, v6e and v7x.
    out_bf16 = nonlinear_decoder_forward(
        x, tuple(weights), tuple(biases), org_norm, ids,
        out_dim=out_dim)
    out_bf16 = jax.block_until_ready(out_bf16)
    assert out_bf16.shape == (batch, out_dim)
    assert jnp.allclose(out_bf16, ref, atol=5e-2, rtol=5e-2), "bf16 path mismatch vs reference"

    print("KERNEL_OK")
</pallas_src>

<mosaic_0001>
module attributes {stable_mosaic.version = 11 : i64} {
  func.func @kernel(%arg0: i32, %arg1: memref<256x32xf32, #tpu.memory_space<vmem>>, %arg2: memref<32x128xf32, #tpu.memory_space<vmem>>, %arg3: memref<1x128xf32, #tpu.memory_space<vmem>>, %arg4: memref<128x128xf32, #tpu.memory_space<vmem>>, %arg5: memref<1x128xf32, #tpu.memory_space<vmem>>, %arg6: memref<128x256xf32, #tpu.memory_space<vmem>>, %arg7: memref<1x256xf32, #tpu.memory_space<vmem>>, %arg8: memref<256x1xf32, #tpu.memory_space<vmem>>, %arg9: memref<256x256xf32, #tpu.memory_space<vmem>>) attributes {dimension_semantics = [#tpu.dimension_semantics<parallel>], iteration_bounds = array<i64: 2>, scalar_prefetch = 0 : i64, scratch_operands = 0 : i64, tpu.core_type = #tpu.core_type<tc>, window_params = [{transform_indices = @transform_0, window_bounds = array<i64: 256, 32>}, {pipeline_mode = #tpu.pipeline_mode<synchronous>, transform_indices = @transform_1, window_bounds = array<i64: 32, 128>}, {pipeline_mode = #tpu.pipeline_mode<synchronous>, transform_indices = @transform_2, window_bounds = array<i64: 1, 128>}, {pipeline_mode = #tpu.pipeline_mode<synchronous>, transform_indices = @transform_3, window_bounds = array<i64: 128, 128>}, {pipeline_mode = #tpu.pipeline_mode<synchronous>, transform_indices = @transform_4, window_bounds = array<i64: 1, 128>}, {pipeline_mode = #tpu.pipeline_mode<synchronous>, transform_indices = @transform_5, window_bounds = array<i64: 128, 256>}, {pipeline_mode = #tpu.pipeline_mode<synchronous>, transform_indices = @transform_6, window_bounds = array<i64: 1, 256>}, {transform_indices = @transform_7, window_bounds = array<i64: 256, 1>}, {transform_indices = @transform_8, window_bounds = array<i64: 256, 256>}]} {
    %c0 = arith.constant 0 : index
    %c0_0 = arith.constant 0 : index
    %0 = vector.load %arg1[%c0, %c0_0] : memref<256x32xf32, #tpu.memory_space<vmem>>, vector<256x32xf32>
    %c0_1 = arith.constant 0 : index
    %c0_2 = arith.constant 0 : index
    %1 = vector.load %arg2[%c0_1, %c0_2] : memref<32x128xf32, #tpu.memory_space<vmem>>, vector<32x128xf32>
    %c0_3 = arith.constant 0 : index
    %c0_4 = arith.constant 0 : index
    %2 = vector.load %arg3[%c0_3, %c0_4] : memref<1x128xf32, #tpu.memory_space<vmem>>, vector<1x128xf32>
    %cst = arith.constant dense<0.000000e+00> : vector<256x128xf32>
    %3 = tpu.matmul %0, %1, %cst {dimension_numbers = #tpu.dot_dimension_numbers<[1], [0], [0], [1], [0, 0, 1, 1], [], []>} : vector<256x32xf32>, vector<32x128xf32>, vector<256x128xf32> -> vector<256x128xf32>
    %4 = vector.broadcast %2 : vector<1x128xf32> to vector<256x128xf32>
    %5 = arith.addf %3, %4 : vector<256x128xf32>
    %cst_5 = arith.constant 0.00999999977 : f32
    %6 = vector.broadcast %cst_5 : f32 to vector<256x128xf32>
    %7 = arith.mulf %6, %5 : vector<256x128xf32>
    %8 = arith.maximumf %5, %7 : vector<256x128xf32>
    %c0_6 = arith.constant 0 : index
    %c0_7 = arith.constant 0 : index
    %9 = vector.load %arg4[%c0_6, %c0_7] : memref<128x128xf32, #tpu.memory_space<vmem>>, vector<128x128xf32>
    %c0_8 = arith.constant 0 : index
    %c0_9 = arith.constant 0 : index
    %10 = vector.load %arg5[%c0_8, %c0_9] : memref<1x128xf32, #tpu.memory_space<vmem>>, vector<1x128xf32>
    %cst_10 = arith.constant dense<0.000000e+00> : vector<256x128xf32>
    %11 = tpu.matmul %8, %9, %cst_10 {dimension_numbers = #tpu.dot_dimension_numbers<[1], [0], [0], [1], [0, 0, 1, 1], [], []>} : vector<256x128xf32>, vector<128x128xf32>, vector<256x128xf32> -> vector<256x128xf32>
    %12 = vector.broadcast %10 : vector<1x128xf32> to vector<256x128xf32>
    %13 = arith.addf %11, %12 : vector<256x128xf32>
    %cst_11 = arith.constant 0.00999999977 : f32
    %14 = vector.broadcast %cst_11 : f32 to vector<256x128xf32>
    %15 = arith.mulf %14, %13 : vector<256x128xf32>
    %16 = arith.maximumf %13, %15 : vector<256x128xf32>
    %c0_12 = arith.constant 0 : index
    %c0_13 = arith.constant 0 : index
    %17 = vector.load %arg6[%c0_12, %c0_13] : memref<128x256xf32, #tpu.memory_space<vmem>>, vector<128x256xf32>
    %c0_14 = arith.constant 0 : index
    %c0_15 = arith.constant 0 : index
    %18 = vector.load %arg7[%c0_14, %c0_15] : memref<1x256xf32, #tpu.memory_space<vmem>>, vector<1x256xf32>
    %cst_16 = arith.constant dense<0.000000e+00> : vector<256x256xf32>
    %19 = tpu.matmul %16, %17, %cst_16 {dimension_numbers = #tpu.dot_dimension_numbers<[1], [0], [0], [1], [0, 0, 1, 1], [], []>} : vector<256x128xf32>, vector<128x256xf32>, vector<256x256xf32> -> vector<256x256xf32>
    %20 = vector.broadcast %18 : vector<1x256xf32> to vector<256x256xf32>
    %21 = arith.addf %19, %20 : vector<256x256xf32>
    %22 = math.tanh %21 : vector<256x256xf32>
    %23 = arith.mulf %22, %22 : vector<256x256xf32>
    %cst_17 = arith.constant dense<0.000000e+00> : vector<256xf32>
    %24 = vector.multi_reduction <add>, %23, %cst_17 [1] : vector<256x256xf32> to vector<256xf32>
    %25 = vector.shape_cast %24 : vector<256xf32> to vector<256x1xf32>
    %c0_18 = arith.constant 0 : index
    %c0_19 = arith.constant 0 : index
    %26 = vector.load %arg8[%c0_18, %c0_19] : memref<256x1xf32, #tpu.memory_space<vmem>>, vector<256x1xf32>
    %27 = math.rsqrt %25 : vector<256x1xf32>
    %28 = arith.mulf %26, %27 : vector<256x1xf32>
    %29 = vector.broadcast %28 : vector<256x1xf32> to vector<256x256xf32>
    %30 = arith.mulf %22, %29 : vector<256x256xf32>
    %c0_20 = arith.constant 0 : index
    %c0_21 = arith.constant 0 : index
    %31 = vector.load %arg9[%c0_20, %c0_21] : memref<256x256xf32, #tpu.memory_space<vmem>>, vector<256x256xf32>
    tpu.vector_store %arg9[%c0_20, %c0_21], %30 {strides = array<i32>} : memref<256x256xf32, #tpu.memory_space<vmem>>, vector<256x256xf32>,
    return
  }
  func.func @transform_0(%arg0: i32) -> (i32, i32) {
    %c0_i32 = arith.constant 0 : i32
    %c0_i32_0 = arith.constant 0 : i32
    return %arg0, %c0_i32 : i32, i32
  }
  func.func @transform_1(%arg0: i32) -> (i32, i32) {
    %c0_i32 = arith.constant 0 : i32
    %c0_i32_0 = arith.constant 0 : i32
    %c0_i32_1 = arith.constant 0 : i32
    return %c0_i32, %c0_i32_0 : i32, i32
  }
  func.func @transform_2(%arg0: i32) -> (i32, i32) {
    %c0_i32 = arith.constant 0 : i32
    %c0_i32_0 = arith.constant 0 : i32
    %c0_i32_1 = arith.constant 0 : i32
    return %c0_i32, %c0_i32_0 : i32, i32
  }
  func.func @transform_3(%arg0: i32) -> (i32, i32) {
    %c0_i32 = arith.constant 0 : i32
    %c0_i32_0 = arith.constant 0 : i32
    %c0_i32_1 = arith.constant 0 : i32
    return %c0_i32, %c0_i32_0 : i32, i32
  }
  func.func @transform_4(%arg0: i32) -> (i32, i32) {
    %c0_i32 = arith.constant 0 : i32
    %c0_i32_0 = arith.constant 0 : i32
    %c0_i32_1 = arith.constant 0 : i32
    return %c0_i32, %c0_i32_0 : i32, i32
  }
  func.func @transform_5(%arg0: i32) -> (i32, i32) {
    %c0_i32 = arith.constant 0 : i32
    %c0_i32_0 = arith.constant 0 : i32
    %c0_i32_1 = arith.constant 0 : i32
    return %c0_i32, %c0_i32_0 : i32, i32
  }
  func.func @transform_6(%arg0: i32) -> (i32, i32) {
    %c0_i32 = arith.constant 0 : i32
    %c0_i32_0 = arith.constant 0 : i32
    %c0_i32_1 = arith.constant 0 : i32
    return %c0_i32, %c0_i32_0 : i32, i32
  }
  func.func @transform_7(%arg0: i32) -> (i32, i32) {
    %c0_i32 = arith.constant 0 : i32
    %c0_i32_0 = arith.constant 0 : i32
    return %arg0, %c0_i32 : i32, i32
  }
  func.func @transform_8(%arg0: i32) -> (i32, i32) {
    %c0_i32 = arith.constant 0 : i32
    %c0_i32_0 = arith.constant 0 : i32
    return %arg0, %c0_i32 : i32, i32
  }
}

</mosaic_0001>

<llo_original>
// kernel: nonlinear_decoder_forward.1
$region0: #{nonlinear_decoder_forward.1}
  #allocation0 [shape = 'u32[]', space=smem, size = 0x4, offset = 0x4, fixed_abs, tag = 'smem constant byte address 0x4 - core index']
  #allocation1 [shape = 'u32[72,128]{1,0:T(1,128)}', space=vmem, size = 0x9000, scoped, tag = 'internal scratch']
  %s0 = inlined_call_operand.vmem [shape: f32[512,32], index: 0, kind: input, shape index: {}]
  %s1 = inlined_call_operand.vmem [shape: f32[32,128], index: 1, kind: input, shape index: {}]
  %s2 = inlined_call_operand.vmem [shape: f32[1,128], index: 2, kind: input, shape index: {}]
  %s3 = inlined_call_operand.vmem [shape: f32[128,128], index: 3, kind: input, shape index: {}]
  %s4 = inlined_call_operand.vmem [shape: f32[1,128], index: 4, kind: input, shape index: {}]
  %s5 = inlined_call_operand.vmem [shape: f32[128,256], index: 5, kind: input, shape index: {}]
  %s6 = inlined_call_operand.vmem [shape: f32[1,256], index: 6, kind: input, shape index: {}]
  %s7 = inlined_call_operand.vmem [shape: f32[512,1], index: 7, kind: input, shape index: {}]
  %s8 = inlined_call_operand.hbm [shape: f32[512,256], index: 8, kind: output, shape index: {}]
  %s9 = sld [smem:[#allocation0]]
  $region65: #{nonlinear_decoder_forward.1} parent=0
    _
  %s11 = ssub.s32 1, %s9
  %s12 = scalar_select 0, %s11, %s9
  $region1: #{nonlinear_decoder_forward.1} parent=0
    #allocation2 [shape = 'u8[524288]{0}', space=vmem, size = 0x80000, scoped, tag = 'output window, operand 0']
    #allocation3 [shape = 's32[2]{0}', space=sflag, size = 0x8, scoped, tag = 'scoped memory for nonlinear_decoder_forward.1']
    %13 = vsyncpa [#allocation3], 0
    %s14 = scalar_lea.sflag [#allocation3], 1
    %15 = vsyncpa %s14, 0
    loop: start=0, step=1, limit=4
    $region2: #{nonlinear_decoder_forward.1} parent=1 // loop_pre_header
      _
    $region3: #{nonlinear_decoder_forward.1} parent=1 // loop_header
      %s17 = sphi 0, %s21
      %p18 = scmp.ge.s32.totalorder %s17, 4
      %s27 = sphi 0, %s29
      %s30 = sphi 0, %s27
      %s31 = sphi 0, %s30
      %s47 = sphi 0, %s31
      %s51 = sphi 0, %s51
      %s53 = sphi 0, %s51
      %s54 = sphi 0, %s53
      %s68 = sphi 0, %s54
      %s72 = sphi 0, %s72
      %s74 = sphi 0, %s72
      %s75 = sphi 0, %s74
      %s89 = sphi 0, %s75
      %s93 = sphi 0, %s93
      %s95 = sphi 0, %s93
      %s96 = sphi 0, %s95
      %s110 = sphi 0, %s96
      %s114 = sphi 0, %s114
      %s116 = sphi 0, %s114
      %s117 = sphi 0, %s116
      %s131 = sphi 0, %s117
      %s135 = sphi 0, %s135
      %s137 = sphi 0, %s135
      %s138 = sphi 0, %s137
      %s152 = sphi 0, %s138
      %s156 = sphi 0, %s156
      %s158 = sphi 0, %s156
      %s159 = sphi 0, %s158
      %s173 = sphi 0, %s159
      %s179 = sphi 0, %s181
      %s182 = sphi 0, %s179
      %s183 = sphi 0, %s182
      %s199 = sphi 0, %s183
      %s205 = sphi 0, %s207
      %s208 = sphi 0, %s205
      %s209 = sphi 0, %s208
      %s225 = sphi 0, %s209
    $region4: #{nonlinear_decoder_forward.1} parent=1 // loop_header_branch
      %20 = sbr.rel (%p18) target = $region8
    $region5: #{nonlinear_decoder_forward.1} parent=1 // loop_body
      %s22 = ssub.s32 %s17, 1
      %s23 = ssub.s32 %s17, 2
      %s24 = sadd.s32 %s17, 1
      %s25 = ssub.s32 %s17, %s24
      %p26 = scmp.eq.s32.totalorder %s25, 0
      %s28 = sadd.s32 %s27, 1
      %s29 = scalar_select %p26, %s27, %s28
      %p32 = pneg %p26
      %p33 = scmp.eq.s32.totalorder %s17, 1
      %p34 = por %p32, %p33
      %p35 = scmp.ne.s32.totalorder %s27, %s30
      %p36 = scmp.eq.s32.totalorder %s17, 0
      %p37 = por %p35, %p36
      %p38 = scmp.ne.s32.totalorder %s27, %s30
      %p39 = scmp.eq.s32.totalorder %s22, 1
      %p40 = por %p38, %p39
      %p41 = scmp.ne.s32.totalorder %s30, %s31
      %p42 = scmp.eq.s32.totalorder %s22, 0
      %p43 = por %p41, %p42
      %p44 = scmp.ne.s32.totalorder %s30, %s31
      %p45 = scmp.eq.s32.totalorder %s23, 1
      %p46 = por %p44, %p45
      %p48 = scmp.ne.s32.totalorder %s31, %s47
      %p49 = scmp.eq.s32.totalorder %s23, 0
      %p50 = por %p48, %p49
      %s52 = sadd.s32 %s51, 1
      %p55 = scmp.eq.s32.totalorder %s17, 1
      %p56 = scmp.ne.s32.totalorder %s51, %s53
      %p57 = scmp.eq.s32.totalorder %s17, 0
      %p58 = por %p56, %p57
      %p59 = scmp.ne.s32.totalorder %s51, %s53
      %p60 = scmp.eq.s32.totalorder %s22, 1
      %p61 = por %p59, %p60
      %p62 = scmp.ne.s32.totalorder %s53, %s54
      %p63 = scmp.eq.s32.totalorder %s22, 0
      %p64 = por %p62, %p63
      %p65 = scmp.ne.s32.totalorder %s53, %s54
      %p66 = scmp.eq.s32.totalorder %s23, 1
      %p67 = por %p65, %p66
      %p69 = scmp.ne.s32.totalorder %s54, %s68
      %p70 = scmp.eq.s32.totalorder %s23, 0
      %p71 = por %p69, %p70
      %s73 = sadd.s32 %s72, 1
      %p76 = scmp.eq.s32.totalorder %s17, 1
      %p77 = scmp.ne.s32.totalorder %s72, %s74
      %p78 = scmp.eq.s32.totalorder %s17, 0
      %p79 = por %p77, %p78
      %p80 = scmp.ne.s32.totalorder %s72, %s74
      %p81 = scmp.eq.s32.totalorder %s22, 1
      %p82 = por %p80, %p81
      %p83 = scmp.ne.s32.totalorder %s74, %s75
      %p84 = scmp.eq.s32.totalorder %s22, 0
      %p85 = por %p83, %p84
      %p86 = scmp.ne.s32.totalorder %s74, %s75
      %p87 = scmp.eq.s32.totalorder %s23, 1
      %p88 = por %p86, %p87
      %p90 = scmp.ne.s32.totalorder %s75, %s89
      %p91 = scmp.eq.s32.totalorder %s23, 0
      %p92 = por %p90, %p91
      %s94 = sadd.s32 %s93, 1
      %p97 = scmp.eq.s32.totalorder %s17, 1
      %p98 = scmp.ne.s32.totalorder %s93, %s95
      %p99 = scmp.eq.s32.totalorder %s17, 0
      %p100 = por %p98, %p99
      %p101 = scmp.ne.s32.totalorder %s93, %s95
      %p102 = scmp.eq.s32.totalorder %s22, 1
      %p103 = por %p101, %p102
      %p104 = scmp.ne.s32.totalorder %s95, %s96
      %p105 = scmp.eq.s32.totalorder %s22, 0
      %p106 = por %p104, %p105
      %p107 = scmp.ne.s32.totalorder %s95, %s96
      %p108 = scmp.eq.s32.totalorder %s23, 1
      %p109 = por %p107, %p108
      %p111 = scmp.ne.s32.totalorder %s96, %s110
      %p112 = scmp.eq.s32.totalorder %s23, 0
      %p113 = por %p111, %p112
      %s115 = sadd.s32 %s114, 1
      %p118 = scmp.eq.s32.totalorder %s17, 1
      %p119 = scmp.ne.s32.totalorder %s114, %s116
      %p120 = scmp.eq.s32.totalorder %s17, 0
      %p121 = por %p119, %p120
      %p122 = scmp.ne.s32.totalorder %s114, %s116
      %p123 = scmp.eq.s32.totalorder %s22, 1
      %p124 = por %p122, %p123
      %p125 = scmp.ne.s32.totalorder %s116, %s117
      %p126 = scmp.eq.s32.totalorder %s22, 0
      %p127 = por %p125, %p126
      %p128 = scmp.ne.s32.totalorder %s116, %s117
      %p129 = scmp.eq.s32.totalorder %s23, 1
      %p130 = por %p128, %p129
      %p132 = scmp.ne.s32.totalorder %s117, %s131
      %p133 = scmp.eq.s32.totalorder %s23, 0
      %p134 = por %p132, %p133
      %s136 = sadd.s32 %s135, 1
      %p139 = scmp.eq.s32.totalorder %s17, 1
      %p140 = scmp.ne.s32.totalorder %s135, %s137
      %p141 = scmp.eq.s32.totalorder %s17, 0
      %p142 = por %p140, %p141
      %p143 = scmp.ne.s32.totalorder %s135, %s137
      %p144 = scmp.eq.s32.totalorder %s22, 1
      %p145 = por %p143, %p144
      %p146 = scmp.ne.s32.totalorder %s137, %s138
      %p147 = scmp.eq.s32.totalorder %s22, 0
      %p148 = por %p146, %p147
      %p149 = scmp.ne.s32.totalorder %s137, %s138
      %p150 = scmp.eq.s32.totalorder %s23, 1
      %p151 = por %p149, %p150
      %p153 = scmp.ne.s32.totalorder %s138, %s152
      %p154 = scmp.eq.s32.totalorder %s23, 0
      %p155 = por %p153, %p154
      %s157 = sadd.s32 %s156, 1
      %p160 = scmp.eq.s32.totalorder %s17, 1
      %p161 = scmp.ne.s32.totalorder %s156, %s158
      %p162 = scmp.eq.s32.totalorder %s17, 0
      %p163 = por %p161, %p162
      %p164 = scmp.ne.s32.totalorder %s156, %s158
      %p165 = scmp.eq.s32.totalorder %s22, 1
      %p166 = por %p164, %p165
      %p167 = scmp.ne.s32.totalorder %s158, %s159
      %p168 = scmp.eq.s32.totalorder %s22, 0
      %p169 = por %p167, %p168
      %p170 = scmp.ne.s32.totalorder %s158, %s159
      %p171 = scmp.eq.s32.totalorder %s23, 1
      %p172 = por %p170, %p171
      %p174 = scmp.ne.s32.totalorder %s159, %s173
      %p175 = scmp.eq.s32.totalorder %s23, 0
      %p176 = por %p174, %p175
      %s177 = ssub.s32 %s17, %s24
      %p178 = scmp.eq.s32.totalorder %s177, 0
      %s180 = sadd.s32 %s179, 1
      %s181 = scalar_select %p178, %s179, %s180
      %p184 = pneg %p178
      %p185 = scmp.eq.s32.totalorder %s17, 1
      %p186 = por %p184, %p185
      %p187 = scmp.ne.s32.totalorder %s179, %s182
      %p188 = scmp.eq.s32.totalorder %s17, 0
      %p189 = por %p187, %p188
      %p190 = scmp.ne.s32.totalorder %s179, %s182
      %p191 = scmp.eq.s32.totalorder %s22, 1
      %p192 = por %p190, %p191
      %p193 = scmp.ne.s32.totalorder %s182, %s183
      %p194 = scmp.eq.s32.totalorder %s22, 0
      %p195 = por %p193, %p194
      %p196 = scmp.ne.s32.totalorder %s182, %s183
      %p197 = scmp.eq.s32.totalorder %s23, 1
      %p198 = por %p196, %p197
      %p200 = scmp.ne.s32.totalorder %s183, %s199
      %p201 = scmp.eq.s32.totalorder %s23, 0
      %p202 = por %p200, %p201
      %s203 = ssub.s32 %s17, %s24
      %p204 = scmp.eq.s32.totalorder %s203, 0
      %s206 = sadd.s32 %s205, 1
      %s207 = scalar_select %p204, %s205, %s206
      %p210 = pneg %p204
      %p211 = scmp.eq.s32.totalorder %s17, 1
      %p212 = por %p210, %p211
      %p213 = scmp.ne.s32.totalorder %s205, %s208
      %p214 = scmp.eq.s32.totalorder %s17, 0
      %p215 = por %p213, %p214
      %p216 = scmp.ne.s32.totalorder %s205, %s208
      %p217 = scmp.eq.s32.totalorder %s22, 1
      %p218 = por %p216, %p217
      %p219 = scmp.ne.s32.totalorder %s208, %s209
      %p220 = scmp.eq.s32.totalorder %s22, 0
      %p221 = por %p219, %p220
      %p222 = scmp.ne.s32.totalorder %s208, %s209
      %p223 = scmp.eq.s32.totalorder %s23, 1
      %p224 = por %p222, %p223
      %p226 = scmp.ne.s32.totalorder %s209, %s225
      %p227 = scmp.eq.s32.totalorder %s23, 0
      %p228 = por %p226, %p227
      %p229 = scmp.le.s32.totalorder 1, %s17
      %p230 = scmp.lt.s32.totalorder %s17, 3
      %p231 = pnand %p229, %p230
      %p232 = pneg %p231
      // Predicated region
      $region9: #{nonlinear_decoder_forward.1} parent=5 // pred_check
        _
      $region10: #{nonlinear_decoder_forward.1} parent=5 // pred_check_branch
        %234 = sbr.rel (%p231) target = $region12
      $region11: #{nonlinear_decoder_forward.1} parent=5 // pred_region
        %s235 = ssub.s32 %s17, 1
        // Predicated region
        $region13: #{nonlinear_decoder_forward.1} parent=11 // pred_check
          %p236 = pneg %p64
        $region14: #{nonlinear_decoder_forward.1} parent=11 // pred_check_branch
          %238 = sbr.rel (%p236) target = $region16
        $region15: #{nonlinear_decoder_forward.1} parent=11 // pred_region
          _
        $region16: #{nonlinear_decoder_forward.1} parent=11 // pred_fallthru
          _
        // Predicated region
        $region17: #{nonlinear_decoder_forward.1} parent=11 // pred_check
          %p239 = pneg %p85
        $region18: #{nonlinear_decoder_forward.1} parent=11 // pred_check_branch
          %241 = sbr.rel (%p239) target = $region20
        $region19: #{nonlinear_decoder_forward.1} parent=11 // pred_region
          _
        $region20: #{nonlinear_decoder_forward.1} parent=11 // pred_fallthru
          _
        // Predicated region
        $region21: #{nonlinear_decoder_forward.1} parent=11 // pred_check
          %p242 = pneg %p106
        $region22: #{nonlinear_decoder_forward.1} parent=11 // pred_check_branch
          %244 = sbr.rel (%p242) target = $region24
        $region23: #{nonlinear_decoder_forward.1} parent=11 // pred_region
          _
        $region24: #{nonlinear_decoder_forward.1} parent=11 // pred_fallthru
          _
        // Predicated region
        $region25: #{nonlinear_decoder_forward.1} parent=11 // pred_check
          %p245 = pneg %p127
        $region26: #{nonlinear_decoder_forward.1} parent=11 // pred_check_branch
          %247 = sbr.rel (%p245) target = $region28
        $region27: #{nonlinear_decoder_forward.1} parent=11 // pred_region
          _
        $region28: #{nonlinear_decoder_forward.1} parent=11 // pred_fallthru
          _
        // Predicated region
        $region29: #{nonlinear_decoder_forward.1} parent=11 // pred_check
          %p248 = pneg %p148
        $region30: #{nonlinear_decoder_forward.1} parent=11 // pred_check_branch
          %250 = sbr.rel (%p248) target = $region32
        $region31: #{nonlinear_decoder_forward.1} parent=11 // pred_region
          _
        $region32: #{nonlinear_decoder_forward.1} parent=11 // pred_fallthru
          _
        // Predicated region
        $region33: #{nonlinear_decoder_forward.1} parent=11 // pred_check
          %p251 = pneg %p169
        $region34: #{nonlinear_decoder_forward.1} parent=11 // pred_check_branch
          %253 = sbr.rel (%p251) target = $region36
        $region35: #{nonlinear_decoder_forward.1} parent=11 // pred_region
          _
        $region36: #{nonlinear_decoder_forward.1} parent=11 // pred_fallthru
          _
      $region12: #{nonlinear_decoder_forward.1} parent=5 // pred_fallthru
        _
      %p254 = scmp.lt.s32.totalorder %s17, 2
      // Predicated region
      $region37: #{nonlinear_decoder_forward.1} parent=5 // pred_check
        %p255 = pneg %p254
      $region38: #{nonlinear_decoder_forward.1} parent=5 // pred_check_branch
        %257 = sbr.rel (%p255) target = $region40
      $region39: #{nonlinear_decoder_forward.1} parent=5 // pred_region
        // Predicated region
        $region41: #{nonlinear_decoder_forward.1} parent=39 // pred_check
          %p258 = pneg %p37
        $region42: #{nonlinear_decoder_forward.1} parent=39 // pred_check_branch
          %260 = sbr.rel (%p258) target = $region44
        $region43: #{nonlinear_decoder_forward.1} parent=39 // pred_region
          %s261 = smul.u32 32, %s17
          %p262 = scmp.lt.s32.totalorder %s261, 63
          %s263 = scalar_select %p262, %s261, 63
          %s264 = smul.addr %s263, 8
          %s265 = scalar_lea.vmem %s0, %s264
          %s266 = smul.u32 32, %s17
        $region44: #{nonlinear_decoder_forward.1} parent=39 // pred_fallthru
          _
        // Predicated region
        $region45: #{nonlinear_decoder_forward.1} parent=39 // pred_check
          %p267 = pneg %p189
        $region46: #{nonlinear_decoder_forward.1} parent=39 // pred_check_branch
          %269 = sbr.rel (%p267) target = $region48
        $region47: #{nonlinear_decoder_forward.1} parent=39 // pred_region
          %s270 = smul.u32 32, %s17
          %p271 = scmp.lt.s32.totalorder %s270, 63
          %s272 = scalar_select %p271, %s270, 63
          %s273 = smul.addr %s272, 8
          %s274 = scalar_lea.vmem %s7, %s273
          %s275 = smul.u32 32, %s17
        $region48: #{nonlinear_decoder_forward.1} parent=39 // pred_fallthru
          _
      $region40: #{nonlinear_decoder_forward.1} parent=5 // pred_fallthru
        _
      %p276 = scmp.le.s32.totalorder 1, %s17
      %p277 = scmp.lt.s32.totalorder %s17, 3
      %p278 = pnand %p276, %p277
      %p279 = pneg %p278
      // Predicated region
      $region49: #{nonlinear_decoder_forward.1} parent=5 // pred_check
        _
      $region50: #{nonlinear_decoder_forward.1} parent=5 // pred_check_branch
        %281 = sbr.rel (%p278) target = $region52
      $region51: #{nonlinear_decoder_forward.1} parent=5 // pred_region
        %s282 = ssub.s32 %s17, 1
        %s283 = smul.u32 32, %s22
        %p284 = scmp.lt.s32.totalorder %s283, 63
        %s285 = scalar_select %p284, %s283, 63
        %s286 = smul.addr %s285, 8
        %s287 = scalar_lea.vmem %s0, %s286
        %p288 = pneg %p43
        %p289 = pneg %p40
        %p290 = pneg %p64
        %p291 = pneg %p61
        %p292 = pneg %p85
        %p293 = pneg %p82
        %p294 = pneg %p106
        %p295 = pneg %p103
        %p296 = pneg %p127
        %p297 = pneg %p124
        %p298 = pneg %p148
        %p299 = pneg %p145
        %p300 = pneg %p169
        %p301 = pneg %p166
        %s302 = smul.u32 32, %s22
        %p303 = scmp.lt.s32.totalorder %s302, 63
        %s304 = scalar_select %p303, %s302, 63
        %s305 = smul.addr %s304, 8
        %s306 = scalar_lea.vmem %s7, %s305
        %p307 = pneg %p195
        %p308 = pneg %p192
        %p309 = pneg %p221
        %p310 = pneg %p218
        %s311 = sand.u32 %s208, 1
        %s312 = scalar_lea.sflag [#allocation3], %s311
        %s313 = sand.u32 %s208, 1
        %s314 = smul.addr %s313, 512
        %s315 = scalar_lea.vmem [#allocation2], %s314
        %s316 = smul.u32 32, %s22
        %p317 = scmp.lt.s32.totalorder %s316, 63
        %s318 = scalar_select %p317, %s316, 63
        %s319 = smul.addr %s318, 8
        %s320 = scalar_lea.vmem %s0, %s319
        %s321 = smul.u32 32, %s22
        %s322 = smul.u32 32, %s22
        %p323 = scmp.lt.s32.totalorder %s322, 63
        %s324 = scalar_select %p323, %s322, 63
        %s325 = smul.addr %s324, 8
        %s326 = scalar_lea.vmem %s7, %s325
        %s327 = smul.u32 32, %s22
        %s328 = smul.u32 32, %s22
        %v329 = vld [vmem:[%s320] sm:$0xff]
        %v330 = vld [vmem:[%s320 + $0x8] sm:$0xff]
        %v331 = vld [vmem:[%s320 + $0x10] sm:$0xff]
        %v332 = vld [vmem:[%s320 + $0x18] sm:$0xff]
        %v333 = vld [vmem:[%s320 + $0x20] sm:$0xff]
        %v334 = vld [vmem:[%s320 + $0x28] sm:$0xff]
        %v335 = vld [vmem:[%s320 + $0x30] sm:$0xff]
        %v336 = vld [vmem:[%s320 + $0x38] sm:$0xff]
        %v337 = vld [vmem:[%s320 + $0x40] sm:$0xff]
        %v338 = vld [vmem:[%s320 + $0x48] sm:$0xff]
        %v339 = vld [vmem:[%s320 + $0x50] sm:$0xff]
        %v340 = vld [vmem:[%s320 + $0x58] sm:$0xff]
        %v341 = vld [vmem:[%s320 + $0x60] sm:$0xff]
        %v342 = vld [vmem:[%s320 + $0x68] sm:$0xff]
        %v343 = vld [vmem:[%s320 + $0x70] sm:$0xff]
        %v344 = vld [vmem:[%s320 + $0x78] sm:$0xff]
        %v345 = vld [vmem:[%s320 + $0x80] sm:$0xff]
        %v346 = vld [vmem:[%s320 + $0x88] sm:$0xff]
        %v347 = vld [vmem:[%s320 + $0x90] sm:$0xff]
        %v348 = vld [vmem:[%s320 + $0x98] sm:$0xff]
        %v349 = vld [vmem:[%s320 + $0xa0] sm:$0xff]
        %v350 = vld [vmem:[%s320 + $0xa8] sm:$0xff]
        %v351 = vld [vmem:[%s320 + $0xb0] sm:$0xff]
        %v352 = vld [vmem:[%s320 + $0xb8] sm:$0xff]
        %v353 = vld [vmem:[%s320 + $0xc0] sm:$0xff]
        %v354 = vld [vmem:[%s320 + $0xc8] sm:$0xff]
        %v355 = vld [vmem:[%s320 + $0xd0] sm:$0xff]
        %v356 = vld [vmem:[%s320 + $0xd8] sm:$0xff]
        %v357 = vld [vmem:[%s320 + $0xe0] sm:$0xff]
        %v358 = vld [vmem:[%s320 + $0xe8] sm:$0xff]
        %v359 = vld [vmem:[%s320 + $0xf0] sm:$0xff]
        %v360 = vld [vmem:[%s320 + $0xf8] sm:$0xff]
        %v361 = vld [vmem:[%s1] sm:$0xff]
        %v362 = vld [vmem:[%s1 + $0x8] sm:$0xff]
        %v363 = vld [vmem:[%s1 + $0x10] sm:$0xff]
        %v364 = vld [vmem:[%s1 + $0x18] sm:$0xff]
        %v365 = vld [vmem:[%s2] sm:$0x1]
        %v367 = vperm.slane %v365, 0
        %vm369 = vcmask 261120
        %v371 = vsel %vm369, %v329, 0
        %v374 = vsel %vm369, %v330, 0
        %v377 = vsel %vm369, %v331, 0
        %v380 = vsel %vm369, %v332, 0
        %v383 = vsel %vm369, %v333, 0
        %v386 = vsel %vm369, %v334, 0
        %v389 = vsel %vm369, %v335, 0
        %v392 = vsel %vm369, %v336, 0
        %v395 = vsel %vm369, %v337, 0
        %v398 = vsel %vm369, %v338, 0
        %v401 = vsel %vm369, %v339, 0
        %v404 = vsel %vm369, %v340, 0
        %v407 = vsel %vm369, %v341, 0
        %v410 = vsel %vm369, %v342, 0
        %v413 = vsel %vm369, %v343, 0
        %v416 = vsel %vm369, %v344, 0
        %v419 = vsel %vm369, %v345, 0
        %v422 = vsel %vm369, %v346, 0
        %v425 = vsel %vm369, %v347, 0
        %v428 = vsel %vm369, %v348, 0
        %v431 = vsel %vm369, %v349, 0
        %v434 = vsel %vm369, %v350, 0
        %v437 = vsel %vm369, %v351, 0
        %v440 = vsel %vm369, %v352, 0
        %v443 = vsel %vm369, %v353, 0
        %v446 = vsel %vm369, %v354, 0
        %v449 = vsel %vm369, %v355, 0
        %v452 = vsel %vm369, %v356, 0
        %v455 = vsel %vm369, %v357, 0
        %v458 = vsel %vm369, %v358, 0
        %v461 = vsel %vm369, %v359, 0
        %v464 = vsel %vm369, %v360, 0
        %466 = vmatpush.msra.mxu0 0.0
        %467 = vmatpush.msra.mxu0 0.0
        %468 = vmatpush.msra.mxu0 0.0
        %469 = vmatpush.msra.mxu0 0.0
        %470 = vmatpush.msra.mxu0 0.0
        %471 = vmatpush.msra.mxu0 0.0
        %472 = vmatpush.msra.mxu0 0.0
        %473 = vmatpush.msra.mxu0 0.0
        %474 = vmatpush.msra.mxu0 0.0
        %475 = vmatpush.msra.mxu0 0.0
        %476 = vmatpush.msra.mxu0 0.0
        %477 = vmatpush.msra.mxu0 0.0
        %478 = vmatpush.msra.mxu0 %v364
        %479 = vmatpush.msra.mxu0 %v363
        %480 = vmatpush.msra.mxu0 %v362
        %481 = vmatpush.msra.mxu0 %v361
        %482 = vmatmul.f32.gmra.mxu0 %v371
        %v483 = vpop.f32.mrf.mxu0
        %v484 = vadd.f32 %v367, %v483
        %485 = vmatmul.f32.gmra.mxu0 %v374
        %v486 = vpop.f32.mrf.mxu0
        %v487 = vadd.f32 %v367, %v486
        %488 = vmatmul.f32.gmra.mxu0 %v377
        %v489 = vpop.f32.mrf.mxu0
        %v490 = vadd.f32 %v367, %v489
        %491 = vmatmul.f32.gmra.mxu0 %v380
        %v492 = vpop.f32.mrf.mxu0
        %v493 = vadd.f32 %v367, %v492
        %494 = vmatmul.f32.gmra.mxu0 %v383
        %v495 = vpop.f32.mrf.mxu0
        %v496 = vadd.f32 %v367, %v495
        %497 = vmatmul.f32.gmra.mxu0 %v386
        %v498 = vpop.f32.mrf.mxu0
        %v499 = vadd.f32 %v367, %v498
        %500 = vmatmul.f32.gmra.mxu0 %v389
        %v501 = vpop.f32.mrf.mxu0
        %v502 = vadd.f32 %v367, %v501
        %503 = vmatmul.f32.gmra.mxu0 %v392
        %v504 = vpop.f32.mrf.mxu0
        %v505 = vadd.f32 %v367, %v504
        %506 = vmatmul.f32.gmra.mxu0 %v395
        %v507 = vpop.f32.mrf.mxu0
        %v508 = vadd.f32 %v367, %v507
        %509 = vmatmul.f32.gmra.mxu0 %v398
        %v510 = vpop.f32.mrf.mxu0
        %v511 = vadd.f32 %v367, %v510
        %512 = vmatmul.f32.gmra.mxu0 %v401
        %v513 = vpop.f32.mrf.mxu0
        %v514 = vadd.f32 %v367, %v513
        %515 = vmatmul.f32.gmra.mxu0 %v404
        %v516 = vpop.f32.mrf.mxu0
        %v517 = vadd.f32 %v367, %v516
        %518 = vmatmul.f32.gmra.mxu0 %v407
        %v519 = vpop.f32.mrf.mxu0
        %v520 = vadd.f32 %v367, %v519
        %521 = vmatmul.f32.gmra.mxu0 %v410
        %v522 = vpop.f32.mrf.mxu0
        %v523 = vadd.f32 %v367, %v522
        %524 = vmatmul.f32.gmra.mxu0 %v413
        %v525 = vpop.f32.mrf.mxu0
        %v526 = vadd.f32 %v367, %v525
        %527 = vmatmul.f32.gmra.mxu0 %v416
        %v528 = vpop.f32.mrf.mxu0
        %v529 = vadd.f32 %v367, %v528
        %530 = vmatmul.f32.gmra.mxu0 %v419
        %v531 = vpop.f32.mrf.mxu0
        %v532 = vadd.f32 %v367, %v531
        %533 = vmatmul.f32.gmra.mxu0 %v422
        %v534 = vpop.f32.mrf.mxu0
        %v535 = vadd.f32 %v367, %v534
        %536 = vmatmul.f32.gmra.mxu0 %v425
        %v537 = vpop.f32.mrf.mxu0
        %v538 = vadd.f32 %v367, %v537
        %539 = vmatmul.f32.gmra.mxu0 %v428
        %v540 = vpop.f32.mrf.mxu0
        %v541 = vadd.f32 %v367, %v540
        %542 = vmatmul.f32.gmra.mxu0 %v431
        %v543 = vpop.f32.mrf.mxu0
        %v544 = vadd.f32 %v367, %v543
        %545 = vmatmul.f32.gmra.mxu0 %v434
        %v546 = vpop.f32.mrf.mxu0
        %v547 = vadd.f32 %v367, %v546
        %548 = vmatmul.f32.gmra.mxu0 %v437
        %v549 = vpop.f32.mrf.mxu0
        %v550 = vadd.f32 %v367, %v549
        %551 = vmatmul.f32.gmra.mxu0 %v440
        %v552 = vpop.f32.mrf.mxu0
        %v553 = vadd.f32 %v367, %v552
        %554 = vmatmul.f32.gmra.mxu0 %v443
        %v555 = vpop.f32.mrf.mxu0
        %v556 = vadd.f32 %v367, %v555
        %557 = vmatmul.f32.gmra.mxu0 %v446
        %v558 = vpop.f32.mrf.mxu0
        %v559 = vadd.f32 %v367, %v558
        %560 = vmatmul.f32.gmra.mxu0 %v449
        %v561 = vpop.f32.mrf.mxu0
        %v562 = vadd.f32 %v367, %v561
        %563 = vmatmul.f32.gmra.mxu0 %v452
        %v564 = vpop.f32.mrf.mxu0
        %v565 = vadd.f32 %v367, %v564
        %566 = vmatmul.f32.gmra.mxu0 %v455
        %v567 = vpop.f32.mrf.mxu0
        %v568 = vadd.f32 %v367, %v567
        %569 = vmatmul.f32.gmra.mxu0 %v458
        %v570 = vpop.f32.mrf.mxu0
        %v571 = vadd.f32 %v367, %v570
        %572 = vmatmul.f32.gmra.mxu0 %v461
        %v573 = vpop.f32.mrf.mxu0
        %v574 = vadd.f32 %v367, %v573
        %575 = vmatmul.f32.gmra.mxu0 %v464
        %v576 = vpop.f32.mrf.mxu0
        %v577 = vadd.f32 %v367, %v576
        %578 = vdwg.mxu0
        %v579 = vmul.f32 %v484, 0.01
        %v580 = vmul.f32 %v487, 0.01
        %v581 = vmul.f32 %v490, 0.01
        %v582 = vmul.f32 %v493, 0.01
        %v583 = vmul.f32 %v496, 0.01
        %v584 = vmul.f32 %v499, 0.01
        %v585 = vmul.f32 %v502, 0.01
        %v586 = vmul.f32 %v505, 0.01
        %v587 = vmul.f32 %v508, 0.01
        %v588 = vmul.f32 %v511, 0.01
        %v589 = vmul.f32 %v514, 0.01
        %v590 = vmul.f32 %v517, 0.01
        %v591 = vmul.f32 %v520, 0.01
        %v592 = vmul.f32 %v523, 0.01
        %v593 = vmul.f32 %v526, 0.01
        %v594 = vmul.f32 %v529, 0.01
        %v595 = vmul.f32 %v532, 0.01
        %v596 = vmul.f32 %v535, 0.01
        %v597 = vmul.f32 %v538, 0.01
        %v598 = vmul.f32 %v541, 0.01
        %v599 = vmul.f32 %v544, 0.01
        %v600 = vmul.f32 %v547, 0.01
        %v601 = vmul.f32 %v550, 0.01
        %v602 = vmul.f32 %v553, 0.01
        %v603 = vmul.f32 %v556, 0.01
        %v604 = vmul.f32 %v559, 0.01
        %v605 = vmul.f32 %v562, 0.01
        %v606 = vmul.f32 %v565, 0.01
        %v607 = vmul.f32 %v568, 0.01
        %v608 = vmul.f32 %v571, 0.01
        %v609 = vmul.f32 %v574, 0.01
        %v610 = vmul.f32 %v577, 0.01
        %v611 = vmax.f32 %v484, %v579
        %v612 = vmax.f32 %v487, %v580
        %v613 = vmax.f32 %v490, %v581
        %v614 = vmax.f32 %v493, %v582
        %v615 = vmax.f32 %v496, %v583
        %v616 = vmax.f32 %v499, %v584
        %v617 = vmax.f32 %v502, %v585
        %v618 = vmax.f32 %v505, %v586
        %v619 = vmax.f32 %v508, %v587
        %v620 = vmax.f32 %v511, %v588
        %v621 = vmax.f32 %v514, %v589
        %v622 = vmax.f32 %v517, %v590
        %v623 = vmax.f32 %v520, %v591
        %v624 = vmax.f32 %v523, %v592
        %v625 = vmax.f32 %v526, %v593
        %v626 = vmax.f32 %v529, %v594
        %v627 = vmax.f32 %v532, %v595
        %v628 = vmax.f32 %v535, %v596
        %v629 = vmax.f32 %v538, %v597
        %v630 = vmax.f32 %v541, %v598
        %v631 = vmax.f32 %v544, %v599
        %v632 = vmax.f32 %v547, %v600
        %v633 = vmax.f32 %v550, %v601
        %v634 = vmax.f32 %v553, %v602
        %v635 = vmax.f32 %v556, %v603
        %v636 = vmax.f32 %v559, %v604
        %v637 = vmax.f32 %v562, %v605
        %v638 = vmax.f32 %v565, %v606
        %v639 = vmax.f32 %v568, %v607
        %v640 = vmax.f32 %v571, %v608
        %v641 = vmax.f32 %v574, %v609
        %v642 = vmax.f32 %v577, %v610
        %v643 = vld [vmem:[%s3] sm:$0xff]
        %v644 = vld [vmem:[%s3 + $0x8] sm:$0xff]
        %v645 = vld [vmem:[%s3 + $0x10] sm:$0xff]
        %v646 = vld [vmem:[%s3 + $0x18] sm:$0xff]
        %v647 = vld [vmem:[%s3 + $0x20] sm:$0xff]
        %v648 = vld [vmem:[%s3 + $0x28] sm:$0xff]
        %v649 = vld [vmem:[%s3 + $0x30] sm:$0xff]
        %v650 = vld [vmem:[%s3 + $0x38] sm:$0xff]
        %v651 = vld [vmem:[%s3 + $0x40] sm:$0xff]
        %v652 = vld [vmem:[%s3 + $0x48] sm:$0xff]
        %v653 = vld [vmem:[%s3 + $0x50] sm:$0xff]
        %v654 = vld [vmem:[%s3 + $0x58] sm:$0xff]
        %v655 = vld [vmem:[%s3 + $0x60] sm:$0xff]
        %v656 = vld [vmem:[%s3 + $0x68] sm:$0xff]
        %v657 = vld [vmem:[%s3 + $0x70] sm:$0xff]
        %v658 = vld [vmem:[%s3 + $0x78] sm:$0xff]
        %v659 = vld [vmem:[%s4] sm:$0x1]
        %v661 = vperm.slane %v659, 0
        %663 = vmatpush.msra.mxu0 %v658
        %664 = vmatpush.msra.mxu0 %v657
        %665 = vmatpush.msra.mxu0 %v656
        %666 = vmatpush.msra.mxu0 %v655
        %667 = vmatpush.msra.mxu0 %v654
        %668 = vmatpush.msra.mxu0 %v653
        %669 = vmatpush.msra.mxu0 %v652
        %670 = vmatpush.msra.mxu0 %v651
        %671 = vmatpush.msra.mxu0 %v650
        %672 = vmatpush.msra.mxu0 %v649
        %673 = vmatpush.msra.mxu0 %v648
        %674 = vmatpush.msra.mxu0 %v647
        %675 = vmatpush.msra.mxu0 %v646
        %676 = vmatpush.msra.mxu0 %v645
        %677 = vmatpush.msra.mxu0 %v644
        %678 = vmatpush.msra.mxu0 %v643
        %679 = vmatmul.f32.gmra.mxu0 %v611
        %v680 = vpop.f32.mrf.mxu0
        %v681 = vadd.f32 %v661, %v680
        %682 = vmatmul.f32.gmra.mxu0 %v612
        %v683 = vpop.f32.mrf.mxu0
        %v684 = vadd.f32 %v661, %v683
        %685 = vmatmul.f32.gmra.mxu0 %v613
        %v686 = vpop.f32.mrf.mxu0
        %v687 = vadd.f32 %v661, %v686
        %688 = vmatmul.f32.gmra.mxu0 %v614
        %v689 = vpop.f32.mrf.mxu0
        %v690 = vadd.f32 %v661, %v689
        %691 = vmatmul.f32.gmra.mxu0 %v615
        %v692 = vpop.f32.mrf.mxu0
        %v693 = vadd.f32 %v661, %v692
        %694 = vmatmul.f32.gmra.mxu0 %v616
        %v695 = vpop.f32.mrf.mxu0
        %v696 = vadd.f32 %v661, %v695
        %697 = vmatmul.f32.gmra.mxu0 %v617
        %v698 = vpop.f32.mrf.mxu0
        %v699 = vadd.f32 %v661, %v698
        %700 = vmatmul.f32.gmra.mxu0 %v618
        %v701 = vpop.f32.mrf.mxu0
        %v702 = vadd.f32 %v661, %v701
        %703 = vmatmul.f32.gmra.mxu0 %v619
        %v704 = vpop.f32.mrf.mxu0
        %v705 = vadd.f32 %v661, %v704
        %706 = vmatmul.f32.gmra.mxu0 %v620
        %v707 = vpop.f32.mrf.mxu0
        %v708 = vadd.f32 %v661, %v707
        %709 = vmatmul.f32.gmra.mxu0 %v621
        %v710 = vpop.f32.mrf.mxu0
        %v711 = vadd.f32 %v661, %v710
        %712 = vmatmul.f32.gmra.mxu0 %v622
        %v713 = vpop.f32.mrf.mxu0
        %v714 = vadd.f32 %v661, %v713
        %715 = vmatmul.f32.gmra.mxu0 %v623
        %v716 = vpop.f32.mrf.mxu0
        %v717 = vadd.f32 %v661, %v716
        %718 = vmatmul.f32.gmra.mxu0 %v624
        %v719 = vpop.f32.mrf.mxu0
        %v720 = vadd.f32 %v661, %v719
        %721 = vmatmul.f32.gmra.mxu0 %v625
        %v722 = vpop.f32.mrf.mxu0
        %v723 = vadd.f32 %v661, %v722
        %724 = vmatmul.f32.gmra.mxu0 %v626
        %v725 = vpop.f32.mrf.mxu0
        %v726 = vadd.f32 %v661, %v725
        %727 = vmatmul.f32.gmra.mxu0 %v627
        %v728 = vpop.f32.mrf.mxu0
        %v729 = vadd.f32 %v661, %v728
        %730 = vmatmul.f32.gmra.mxu0 %v628
        %v731 = vpop.f32.mrf.mxu0
        %v732 = vadd.f32 %v661, %v731
        %733 = vmatmul.f32.gmra.mxu0 %v629
        %v734 = vpop.f32.mrf.mxu0
        %v735 = vadd.f32 %v661, %v734
        %736 = vmatmul.f32.gmra.mxu0 %v630
        %v737 = vpop.f32.mrf.mxu0
        %v738 = vadd.f32 %v661, %v737
        %739 = vmatmul.f32.gmra.mxu0 %v631
        %v740 = vpop.f32.mrf.mxu0
        %v741 = vadd.f32 %v661, %v740
        %742 = vmatmul.f32.gmra.mxu0 %v632
        %v743 = vpop.f32.mrf.mxu0
        %v744 = vadd.f32 %v661, %v743
        %745 = vmatmul.f32.gmra.mxu0 %v633
        %v746 = vpop.f32.mrf.mxu0
        %v747 = vadd.f32 %v661, %v746
        %748 = vmatmul.f32.gmra.mxu0 %v634
        %v749 = vpop.f32.mrf.mxu0
        %v750 = vadd.f32 %v661, %v749
        %751 = vmatmul.f32.gmra.mxu0 %v635
        %v752 = vpop.f32.mrf.mxu0
        %v753 = vadd.f32 %v661, %v752
        %754 = vmatmul.f32.gmra.mxu0 %v636
        %v755 = vpop.f32.mrf.mxu0
        %v756 = vadd.f32 %v661, %v755
        %757 = vmatmul.f32.gmra.mxu0 %v637
        %v758 = vpop.f32.mrf.mxu0
        %v759 = vadd.f32 %v661, %v758
        %760 = vmatmul.f32.gmra.mxu0 %v638
        %v761 = vpop.f32.mrf.mxu0
        %v762 = vadd.f32 %v661, %v761
        %763 = vmatmul.f32.gmra.mxu0 %v639
        %v764 = vpop.f32.mrf.mxu0
        %v765 = vadd.f32 %v661, %v764
        %766 = vmatmul.f32.gmra.mxu0 %v640
        %v767 = vpop.f32.mrf.mxu0
        %v768 = vadd.f32 %v661, %v767
        %769 = vmatmul.f32.gmra.mxu0 %v641
        %v770 = vpop.f32.mrf.mxu0
        %v771 = vadd.f32 %v661, %v770
        %772 = vmatmul.f32.gmra.mxu0 %v642
        %v773 = vpop.f32.mrf.mxu0
        %v774 = vadd.f32 %v661, %v773
        %775 = vdwg.mxu0
        %v776 = vmul.f32 %v681, 0.01
        %v777 = vmul.f32 %v684, 0.01
        %v778 = vmul.f32 %v687, 0.01
        %v779 = vmul.f32 %v690, 0.01
        %v780 = vmul.f32 %v693, 0.01
        %v781 = vmul.f32 %v696, 0.01
        %v782 = vmul.f32 %v699, 0.01
        %v783 = vmul.f32 %v702, 0.01
        %v784 = vmul.f32 %v705, 0.01
        %v785 = vmul.f32 %v708, 0.01
        %v786 = vmul.f32 %v711, 0.01
        %v787 = vmul.f32 %v714, 0.01
        %v788 = vmul.f32 %v717, 0.01
        %v789 = vmul.f32 %v720, 0.01
        %v790 = vmul.f32 %v723, 0.01
        %v791 = vmul.f32 %v726, 0.01
        %v792 = vmul.f32 %v729, 0.01
        %v793 = vmul.f32 %v732, 0.01
        %v794 = vmul.f32 %v735, 0.01
        %v795 = vmul.f32 %v738, 0.01
        %v796 = vmul.f32 %v741, 0.01
        %v797 = vmul.f32 %v744, 0.01
        %v798 = vmul.f32 %v747, 0.01
        %v799 = vmul.f32 %v750, 0.01
        %v800 = vmul.f32 %v753, 0.01
        %v801 = vmul.f32 %v756, 0.01
        %v802 = vmul.f32 %v759, 0.01
        %v803 = vmul.f32 %v762, 0.01
        %v804 = vmul.f32 %v765, 0.01
        %v805 = vmul.f32 %v768, 0.01
        %v806 = vmul.f32 %v771, 0.01
        %v807 = vmul.f32 %v774, 0.01
        %v808 = vmax.f32 %v681, %v776
        %v809 = vmax.f32 %v684, %v777
        %v810 = vmax.f32 %v687, %v778
        %v811 = vmax.f32 %v690, %v779
        %v812 = vmax.f32 %v693, %v780
        %v813 = vmax.f32 %v696, %v781
        %v814 = vmax.f32 %v699, %v782
        %v815 = vmax.f32 %v702, %v783
        %v816 = vmax.f32 %v705, %v784
        %v817 = vmax.f32 %v708, %v785
        %v818 = vmax.f32 %v711, %v786
        %v819 = vmax.f32 %v714, %v787
        %v820 = vmax.f32 %v717, %v788
        %v821 = vmax.f32 %v720, %v789
        %v822 = vmax.f32 %v723, %v790
        %v823 = vmax.f32 %v726, %v791
        %v824 = vmax.f32 %v729, %v792
        %v825 = vmax.f32 %v732, %v793
        %v826 = vmax.f32 %v735, %v794
        %v827 = vmax.f32 %v738, %v795
        %v828 = vmax.f32 %v741, %v796
        %v829 = vmax.f32 %v744, %v797
        %v830 = vmax.f32 %v747, %v798
        %v831 = vmax.f32 %v750, %v799
        %v832 = vmax.f32 %v753, %v800
        %v833 = vmax.f32 %v756, %v801
        %v834 = vmax.f32 %v759, %v802
        %v835 = vmax.f32 %v762, %v803
        %v836 = vmax.f32 %v765, %v804
        %v837 = vmax.f32 %v768, %v805
        %v838 = vmax.f32 %v771, %v806
        %v839 = vmax.f32 %v774, %v807
        %v840 = vld [vmem:[%s5] sm:$0xff]
        %v841 = vld [vmem:[%s5 + $0x8] sm:$0xff]
        %v842 = vld [vmem:[%s5 + $0x10] sm:$0xff]
        %v843 = vld [vmem:[%s5 + $0x18] sm:$0xff]
        %v844 = vld [vmem:[%s5 + $0x20] sm:$0xff]
        %v845 = vld [vmem:[%s5 + $0x28] sm:$0xff]
        %v846 = vld [vmem:[%s5 + $0x30] sm:$0xff]
        %v847 = vld [vmem:[%s5 + $0x38] sm:$0xff]
        %v848 = vld [vmem:[%s5 + $0x40] sm:$0xff]
        %v849 = vld [vmem:[%s5 + $0x48] sm:$0xff]
        %v850 = vld [vmem:[%s5 + $0x50] sm:$0xff]
        %v851 = vld [vmem:[%s5 + $0x58] sm:$0xff]
        %v852 = vld [vmem:[%s5 + $0x60] sm:$0xff]
        %v853 = vld [vmem:[%s5 + $0x68] sm:$0xff]
        %v854 = vld [vmem:[%s5 + $0x70] sm:$0xff]
        %v855 = vld [vmem:[%s5 + $0x78] sm:$0xff]
        %v856 = vld [vmem:[%s5 + $0x80] sm:$0xff]
        %v857 = vld [vmem:[%s5 + $0x88] sm:$0xff]
        %v858 = vld [vmem:[%s5 + $0x90] sm:$0xff]
        %v859 = vld [vmem:[%s5 + $0x98] sm:$0xff]
        %v860 = vld [vmem:[%s5 + $0xa0] sm:$0xff]
        %v861 = vld [vmem:[%s5 + $0xa8] sm:$0xff]
        %v862 = vld [vmem:[%s5 + $0xb0] sm:$0xff]
        %v863 = vld [vmem:[%s5 + $0xb8] sm:$0xff]
        %v864 = vld [vmem:[%s5 + $0xc0] sm:$0xff]
        %v865 = vld [vmem:[%s5 + $0xc8] sm:$0xff]
        %v866 = vld [vmem:[%s5 + $0xd0] sm:$0xff]
        %v867 = vld [vmem:[%s5 + $0xd8] sm:$0xff]
        %v868 = vld [vmem:[%s5 + $0xe0] sm:$0xff]
        %v869 = vld [vmem:[%s5 + $0xe8] sm:$0xff]
        %v870 = vld [vmem:[%s5 + $0xf0] sm:$0xff]
        %v871 = vld [vmem:[%s5 + $0xf8] sm:$0xff]
        %v872 = vld [vmem:[%s6] sm:$0x3]
        %v874 = vperm.slane %v872, 0
        %v875 = vperm.slane %v872, 1
        %878 = vmatpush.msra.mxu0 %v870
        %879 = vmatpush.msra.mxu0 %v868
        %880 = vmatpush.msra.mxu0 %v866
        %881 = vmatpush.msra.mxu0 %v864
        %882 = vmatpush.msra.mxu0 %v862
        %883 = vmatpush.msra.mxu0 %v860
        %884 = vmatpush.msra.mxu0 %v858
        %885 = vmatpush.msra.mxu0 %v856
        %886 = vmatpush.msra.mxu0 %v854
        %887 = vmatpush.msra.mxu0 %v852
        %888 = vmatpush.msra.mxu0 %v850
        %889 = vmatpush.msra.mxu0 %v848
        %890 = vmatpush.msra.mxu0 %v846
        %891 = vmatpush.msra.mxu0 %v844
        %892 = vmatpush.msra.mxu0 %v842
        %893 = vmatpush.msra.mxu0 %v840
        %894 = vmatmul.f32.gmra.mxu0 %v808
        %v895 = vpop.f32.mrf.mxu0
        %v896 = vadd.f32 %v874, %v895
        %897 = vmatmul.f32.gmra.mxu0 %v809
        %v898 = vpop.f32.mrf.mxu0
        %v899 = vadd.f32 %v874, %v898
        %900 = vmatmul.f32.gmra.mxu0 %v810
        %v901 = vpop.f32.mrf.mxu0
        %v902 = vadd.f32 %v874, %v901
        %903 = vmatmul.f32.gmra.mxu0 %v811
        %v904 = vpop.f32.mrf.mxu0
        %v905 = vadd.f32 %v874, %v904
        %906 = vmatmul.f32.gmra.mxu0 %v812
        %v907 = vpop.f32.mrf.mxu0
        %v908 = vadd.f32 %v874, %v907
        %909 = vmatmul.f32.gmra.mxu0 %v813
        %v910 = vpop.f32.mrf.mxu0
        %v911 = vadd.f32 %v874, %v910
        %912 = vmatmul.f32.gmra.mxu0 %v814
        %v913 = vpop.f32.mrf.mxu0
        %v914 = vadd.f32 %v874, %v913
        %915 = vmatmul.f32.gmra.mxu0 %v815
        %v916 = vpop.f32.mrf.mxu0
        %v917 = vadd.f32 %v874, %v916
        %918 = vmatmul.f32.gmra.mxu0 %v816
        %v919 = vpop.f32.mrf.mxu0
        %v920 = vadd.f32 %v874, %v919
        %921 = vmatmul.f32.gmra.mxu0 %v817
        %v922 = vpop.f32.mrf.mxu0
        %v923 = vadd.f32 %v874, %v922
        %924 = vmatmul.f32.gmra.mxu0 %v818
        %v925 = vpop.f32.mrf.mxu0
        %v926 = vadd.f32 %v874, %v925
        %927 = vmatmul.f32.gmra.mxu0 %v819
        %v928 = vpop.f32.mrf.mxu0
        %v929 = vadd.f32 %v874, %v928
        %930 = vmatmul.f32.gmra.mxu0 %v820
        %v931 = vpop.f32.mrf.mxu0
        %v932 = vadd.f32 %v874, %v931
        %933 = vmatmul.f32.gmra.mxu0 %v821
        %v934 = vpop.f32.mrf.mxu0
        %v935 = vadd.f32 %v874, %v934
        %936 = vmatmul.f32.gmra.mxu0 %v822
        %v937 = vpop.f32.mrf.mxu0
        %v938 = vadd.f32 %v874, %v937
        %939 = vmatmul.f32.gmra.mxu0 %v823
        %v940 = vpop.f32.mrf.mxu0
        %v941 = vadd.f32 %v874, %v940
        %942 = vmatmul.f32.gmra.mxu0 %v824
        %v943 = vpop.f32.mrf.mxu0
        %v944 = vadd.f32 %v874, %v943
        %945 = vmatmul.f32.gmra.mxu0 %v825
        %v946 = vpop.f32.mrf.mxu0
        %v947 = vadd.f32 %v874, %v946
        %948 = vmatmul.f32.gmra.mxu0 %v826
        %v949 = vpop.f32.mrf.mxu0
        %v950 = vadd.f32 %v874, %v949
        %951 = vmatmul.f32.gmra.mxu0 %v827
        %v952 = vpop.f32.mrf.mxu0
        %v953 = vadd.f32 %v874, %v952
        %954 = vmatmul.f32.gmra.mxu0 %v828
        %v955 = vpop.f32.mrf.mxu0
        %v956 = vadd.f32 %v874, %v955
        %957 = vmatmul.f32.gmra.mxu0 %v829
        %v958 = vpop.f32.mrf.mxu0
        %v959 = vadd.f32 %v874, %v958
        %960 = vmatmul.f32.gmra.mxu0 %v830
        %v961 = vpop.f32.mrf.mxu0
        %v962 = vadd.f32 %v874, %v961
        %963 = vmatmul.f32.gmra.mxu0 %v831
        %v964 = vpop.f32.mrf.mxu0
        %v965 = vadd.f32 %v874, %v964
        %966 = vmatmul.f32.gmra.mxu0 %v832
        %v967 = vpop.f32.mrf.mxu0
        %v968 = vadd.f32 %v874, %v967
        %969 = vmatmul.f32.gmra.mxu0 %v833
        %v970 = vpop.f32.mrf.mxu0
        %v971 = vadd.f32 %v874, %v970
        %972 = vmatmul.f32.gmra.mxu0 %v834
        %v973 = vpop.f32.mrf.mxu0
        %v974 = vadd.f32 %v874, %v973
        %975 = vmatmul.f32.gmra.mxu0 %v835
        %v976 = vpop.f32.mrf.mxu0
        %v977 = vadd.f32 %v874, %v976
        %978 = vmatmul.f32.gmra.mxu0 %v836
        %v979 = vpop.f32.mrf.mxu0
        %v980 = vadd.f32 %v874, %v979
        %981 = vmatmul.f32.gmra.mxu0 %v837
        %v982 = vpop.f32.mrf.mxu0
        %v983 = vadd.f32 %v874, %v982
        %984 = vmatmul.f32.gmra.mxu0 %v838
        %v985 = vpop.f32.mrf.mxu0
        %v986 = vadd.f32 %v874, %v985
        %987 = vmatmul.f32.gmra.mxu0 %v839
        %v988 = vpop.f32.mrf.mxu0
        %v989 = vadd.f32 %v874, %v988
        %990 = vdwg.mxu0
        %991 = vmatpush.msra.mxu0 %v871
        %992 = vmatpush.msra.mxu0 %v869
        %993 = vmatpush.msra.mxu0 %v867
        %994 = vmatpush.msra.mxu0 %v865
        %995 = vmatpush.msra.mxu0 %v863
        %996 = vmatpush.msra.mxu0 %v861
        %997 = vmatpush.msra.mxu0 %v859
        %998 = vmatpush.msra.mxu0 %v857
        %999 = vmatpush.msra.mxu0 %v855
        %1000 = vmatpush.msra.mxu0 %v853
        %1001 = vmatpush.msra.mxu0 %v851
        %1002 = vmatpush.msra.mxu0 %v849
        %1003 = vmatpush.msra.mxu0 %v847
        %1004 = vmatpush.msra.mxu0 %v845
        %1005 = vmatpush.msra.mxu0 %v843
        %1006 = vmatpush.msra.mxu0 %v841
        %1007 = vmatmul.f32.gmra.mxu0 %v808
        %v1008 = vpop.f32.mrf.mxu0
        %v1009 = vadd.f32 %v875, %v1008
        %1010 = vmatmul.f32.gmra.mxu0 %v809
        %v1011 = vpop.f32.mrf.mxu0
        %v1012 = vadd.f32 %v875, %v1011
        %1013 = vmatmul.f32.gmra.mxu0 %v810
        %v1014 = vpop.f32.mrf.mxu0
        %v1015 = vadd.f32 %v875, %v1014
        %1016 = vmatmul.f32.gmra.mxu0 %v811
        %v1017 = vpop.f32.mrf.mxu0
        %v1018 = vadd.f32 %v875, %v1017
        %1019 = vmatmul.f32.gmra.mxu0 %v812
        %v1020 = vpop.f32.mrf.mxu0
        %v1021 = vadd.f32 %v875, %v1020
        %1022 = vmatmul.f32.gmra.mxu0 %v813
        %v1023 = vpop.f32.mrf.mxu0
        %v1024 = vadd.f32 %v875, %v1023
        %1025 = vmatmul.f32.gmra.mxu0 %v814
        %v1026 = vpop.f32.mrf.mxu0
        %v1027 = vadd.f32 %v875, %v1026
        %1028 = vmatmul.f32.gmra.mxu0 %v815
        %v1029 = vpop.f32.mrf.mxu0
        %v1030 = vadd.f32 %v875, %v1029
        %1031 = vmatmul.f32.gmra.mxu0 %v816
        %v1032 = vpop.f32.mrf.mxu0
        %v1033 = vadd.f32 %v875, %v1032
        %1034 = vmatmul.f32.gmra.mxu0 %v817
        %v1035 = vpop.f32.mrf.mxu0
        %v1036 = vadd.f32 %v875, %v1035
        %1037 = vmatmul.f32.gmra.mxu0 %v818
        %v1038 = vpop.f32.mrf.mxu0
        %v1039 = vadd.f32 %v875, %v1038
        %1040 = vmatmul.f32.gmra.mxu0 %v819
        %v1041 = vpop.f32.mrf.mxu0
        %v1042 = vadd.f32 %v875, %v1041
        %1043 = vmatmul.f32.gmra.mxu0 %v820
        %v1044 = vpop.f32.mrf.mxu0
        %v1045 = vadd.f32 %v875, %v1044
        %1046 = vmatmul.f32.gmra.mxu0 %v821
        %v1047 = vpop.f32.mrf.mxu0
        %v1048 = vadd.f32 %v875, %v1047
        %1049 = vmatmul.f32.gmra.mxu0 %v822
        %v1050 = vpop.f32.mrf.mxu0
        %v1051 = vadd.f32 %v875, %v1050
        %1052 = vmatmul.f32.gmra.mxu0 %v823
        %v1053 = vpop.f32.mrf.mxu0
        %v1054 = vadd.f32 %v875, %v1053
        %1055 = vmatmul.f32.gmra.mxu0 %v824
        %v1056 = vpop.f32.mrf.mxu0
        %v1057 = vadd.f32 %v875, %v1056
        %1058 = vmatmul.f32.gmra.mxu0 %v825
        %v1059 = vpop.f32.mrf.mxu0
        %v1060 = vadd.f32 %v875, %v1059
        %1061 = vmatmul.f32.gmra.mxu0 %v826
        %v1062 = vpop.f32.mrf.mxu0
        %v1063 = vadd.f32 %v875, %v1062
        %1064 = vmatmul.f32.gmra.mxu0 %v827
        %v1065 = vpop.f32.mrf.mxu0
        %v1066 = vadd.f32 %v875, %v1065
        %1067 = vmatmul.f32.gmra.mxu0 %v828
        %v1068 = vpop.f32.mrf.mxu0
        %v1069 = vadd.f32 %v875, %v1068
        %1070 = vmatmul.f32.gmra.mxu0 %v829
        %v1071 = vpop.f32.mrf.mxu0
        %v1072 = vadd.f32 %v875, %v1071
        %1073 = vmatmul.f32.gmra.mxu0 %v830
        %v1074 = vpop.f32.mrf.mxu0
        %v1075 = vadd.f32 %v875, %v1074
        %1076 = vmatmul.f32.gmra.mxu0 %v831
        %v1077 = vpop.f32.mrf.mxu0
        %v1078 = vadd.f32 %v875, %v1077
        %1079 = vmatmul.f32.gmra.mxu0 %v832
        %v1080 = vpop.f32.mrf.mxu0
        %v1081 = vadd.f32 %v875, %v1080
        %1082 = vmatmul.f32.gmra.mxu0 %v833
        %v1083 = vpop.f32.mrf.mxu0
        %v1084 = vadd.f32 %v875, %v1083
        %1085 = vmatmul.f32.gmra.mxu0 %v834
        %v1086 = vpop.f32.mrf.mxu0
        %v1087 = vadd.f32 %v875, %v1086
        %1088 = vmatmul.f32.gmra.mxu0 %v835
        %v1089 = vpop.f32.mrf.mxu0
        %v1090 = vadd.f32 %v875, %v1089
        %1091 = vmatmul.f32.gmra.mxu0 %v836
        %v1092 = vpop.f32.mrf.mxu0
        %v1093 = vadd.f32 %v875, %v1092
        %1094 = vmatmul.f32.gmra.mxu0 %v837
        %v1095 = vpop.f32.mrf.mxu0
        %v1096 = vadd.f32 %v875, %v1095
        %1097 = vmatmul.f32.gmra.mxu0 %v838
        %v1098 = vpop.f32.mrf.mxu0
        %v1099 = vadd.f32 %v875, %v1098
        %1100 = vmatmul.f32.gmra.mxu0 %v839
        %v1101 = vpop.f32.mrf.mxu0
        %v1102 = vadd.f32 %v875, %v1101
        %1103 = vdwg.mxu0
        %v1104 = vtanh.pop %v896
        %v1105 = vtanh.pop %v1009
        %v1106 = vtanh.pop %v899
        %v1107 = vtanh.pop %v1012
        %v1108 = vtanh.pop %v902
        %v1109 = vtanh.pop %v1015
        %v1110 = vtanh.pop %v905
        %v1111 = vtanh.pop %v1018
        %v1112 = vtanh.pop %v908
        %v1113 = vtanh.pop %v1021
        %v1114 = vtanh.pop %v911
        %v1115 = vtanh.pop %v1024
        %v1116 = vtanh.pop %v914
        %v1117 = vtanh.pop %v1027
        %v1118 = vtanh.pop %v917
        %v1119 = vtanh.pop %v1030
        %v1120 = vtanh.pop %v920
        %v1121 = vtanh.pop %v1033
        %v1122 = vtanh.pop %v923
        %v1123 = vtanh.pop %v1036
        %v1124 = vtanh.pop %v926
        %v1125 = vtanh.pop %v1039
        %v1126 = vtanh.pop %v929
        %v1127 = vtanh.pop %v1042
        %v1128 = vtanh.pop %v932
        %v1129 = vtanh.pop %v1045
        %v1130 = vtanh.pop %v935
        %v1131 = vtanh.pop %v1048
        %v1132 = vtanh.pop %v938
        %v1133 = vtanh.pop %v1051
        %v1134 = vtanh.pop %v941
        %v1135 = vtanh.pop %v1054
        %v1136 = vtanh.pop %v944
        %v1137 = vtanh.pop %v1057
        %v1138 = vtanh.pop %v947
        %v1139 = vtanh.pop %v1060
        %v1140 = vtanh.pop %v950
        %v1141 = vtanh.pop %v1063
        %v1142 = vtanh.pop %v953
        %v1143 = vtanh.pop %v1066
        %v1144 = vtanh.pop %v956
        %v1145 = vtanh.pop %v1069
        %v1146 = vtanh.pop %v959
        %v1147 = vtanh.pop %v1072
        %v1148 = vtanh.pop %v962
        %v1149 = vtanh.pop %v1075
        %v1150 = vtanh.pop %v965
        %v1151 = vtanh.pop %v1078
        %v1152 = vtanh.pop %v968
        %v1153 = vtanh.pop %v1081
        %v1154 = vtanh.pop %v971
        %v1155 = vtanh.pop %v1084
        %v1156 = vtanh.pop %v974
        %v1157 = vtanh.pop %v1087
        %v1158 = vtanh.pop %v977
        %v1159 = vtanh.pop %v1090
        %v1160 = vtanh.pop %v980
        %v1161 = vtanh.pop %v1093
        %v1162 = vtanh.pop %v983
        %v1163 = vtanh.pop %v1096
        %v1164 = vtanh.pop %v986
        %v1165 = vtanh.pop %v1099
        %v1166 = vtanh.pop %v989
        %v1167 = vtanh.pop %v1102
        %v1168 = vmul.f32 %v1104, %v1104
        %v1169 = vmul.f32 %v1105, %v1105
        %v1170 = vmul.f32 %v1106, %v1106
        %v1171 = vmul.f32 %v1107, %v1107
        %v1172 = vmul.f32 %v1108, %v1108
        %v1173 = vmul.f32 %v1109, %v1109
        %v1174 = vmul.f32 %v1110, %v1110
        %v1175 = vmul.f32 %v1111, %v1111
        %v1176 = vmul.f32 %v1112, %v1112
        %v1177 = vmul.f32 %v1113, %v1113
        %v1178 = vmul.f32 %v1114, %v1114
        %v1179 = vmul.f32 %v1115, %v1115
        %v1180 = vmul.f32 %v1116, %v1116
        %v1181 = vmul.f32 %v1117, %v1117
        %v1182 = vmul.f32 %v1118, %v1118
        %v1183 = vmul.f32 %v1119, %v1119
        %v1184 = vmul.f32 %v1120, %v1120
        %v1185 = vmul.f32 %v1121, %v1121
        %v1186 = vmul.f32 %v1122, %v1122
        %v1187 = vmul.f32 %v1123, %v1123
        %v1188 = vmul.f32 %v1124, %v1124
        %v1189 = vmul.f32 %v1125, %v1125
        %v1190 = vmul.f32 %v1126, %v1126
        %v1191 = vmul.f32 %v1127, %v1127
        %v1192 = vmul.f32 %v1128, %v1128
        %v1193 = vmul.f32 %v1129, %v1129
        %v1194 = vmul.f32 %v1130, %v1130
        %v1195 = vmul.f32 %v1131, %v1131
        %v1196 = vmul.f32 %v1132, %v1132
        %v1197 = vmul.f32 %v1133, %v1133
        %v1198 = vmul.f32 %v1134, %v1134
        %v1199 = vmul.f32 %v1135, %v1135
        %v1200 = vmul.f32 %v1136, %v1136
        %v1201 = vmul.f32 %v1137, %v1137
        %v1202 = vmul.f32 %v1138, %v1138
        %v1203 = vmul.f32 %v1139, %v1139
        %v1204 = vmul.f32 %v1140, %v1140
        %v1205 = vmul.f32 %v1141, %v1141
        %v1206 = vmul.f32 %v1142, %v1142
        %v1207 = vmul.f32 %v1143, %v1143
        %v1208 = vmul.f32 %v1144, %v1144
        %v1209 = vmul.f32 %v1145, %v1145
        %v1210 = vmul.f32 %v1146, %v1146
        %v1211 = vmul.f32 %v1147, %v1147
        %v1212 = vmul.f32 %v1148, %v1148
        %v1213 = vmul.f32 %v1149, %v1149
        %v1214 = vmul.f32 %v1150, %v1150
        %v1215 = vmul.f32 %v1151, %v1151
        %v1216 = vmul.f32 %v1152, %v1152
        %v1217 = vmul.f32 %v1153, %v1153
        %v1218 = vmul.f32 %v1154, %v1154
        %v1219 = vmul.f32 %v1155, %v1155
        %v1220 = vmul.f32 %v1156, %v1156
        %v1221 = vmul.f32 %v1157, %v1157
        %v1222 = vmul.f32 %v1158, %v1158
        %v1223 = vmul.f32 %v1159, %v1159
        %v1224 = vmul.f32 %v1160, %v1160
        %v1225 = vmul.f32 %v1161, %v1161
        %v1226 = vmul.f32 %v1162, %v1162
        %v1227 = vmul.f32 %v1163, %v1163
        %v1228 = vmul.f32 %v1164, %v1164
        %v1229 = vmul.f32 %v1165, %v1165
        %v1230 = vmul.f32 %v1166, %v1166
        %v1231 = vmul.f32 %v1167, %v1167
        %v1232 = vadd.f32 %v1168, %v1169
        %1233 = vadd.xlane.f32.xlu0 %v1232
        %v1234 = vpop.xlane.xlu0 %1233
        %v1235 = vadd.f32 %v1170, %v1171
        %1236 = vadd.xlane.f32.xlu0 %v1235
        %v1237 = vpop.xlane.xlu0 %1236
        %v1238 = vadd.f32 %v1172, %v1173
        %1239 = vadd.xlane.f32.xlu0 %v1238
        %v1240 = vpop.xlane.xlu0 %1239
        %v1241 = vadd.f32 %v1174, %v1175
        %1242 = vadd.xlane.f32.xlu0 %v1241
        %v1243 = vpop.xlane.xlu0 %1242
        %v1244 = vadd.f32 %v1176, %v1177
        %1245 = vadd.xlane.f32.xlu0 %v1244
        %v1246 = vpop.xlane.xlu0 %1245
        %v1247 = vadd.f32 %v1178, %v1179
        %1248 = vadd.xlane.f32.xlu0 %v1247
        %v1249 = vpop.xlane.xlu0 %1248
        %v1250 = vadd.f32 %v1180, %v1181
        %1251 = vadd.xlane.f32.xlu0 %v1250
        %v1252 = vpop.xlane.xlu0 %1251
        %v1253 = vadd.f32 %v1182, %v1183
        %1254 = vadd.xlane.f32.xlu0 %v1253
        %v1255 = vpop.xlane.xlu0 %1254
        %v1256 = vadd.f32 %v1184, %v1185
        %1257 = vadd.xlane.f32.xlu0 %v1256
        %v1258 = vpop.xlane.xlu0 %1257
        %v1259 = vadd.f32 %v1186, %v1187
        %1260 = vadd.xlane.f32.xlu0 %v1259
        %v1261 = vpop.xlane.xlu0 %1260
        %v1262 = vadd.f32 %v1188, %v1189
        %1263 = vadd.xlane.f32.xlu0 %v1262
        %v1264 = vpop.xlane.xlu0 %1263
        %v1265 = vadd.f32 %v1190, %v1191
        %1266 = vadd.xlane.f32.xlu0 %v1265
        %v1267 = vpop.xlane.xlu0 %1266
        %v1268 = vadd.f32 %v1192, %v1193
        %1269 = vadd.xlane.f32.xlu0 %v1268
        %v1270 = vpop.xlane.xlu0 %1269
        %v1271 = vadd.f32 %v1194, %v1195
        %1272 = vadd.xlane.f32.xlu0 %v1271
        %v1273 = vpop.xlane.xlu0 %1272
        %v1274 = vadd.f32 %v1196, %v1197
        %1275 = vadd.xlane.f32.xlu0 %v1274
        %v1276 = vpop.xlane.xlu0 %1275
        %v1277 = vadd.f32 %v1198, %v1199
        %1278 = vadd.xlane.f32.xlu0 %v1277
        %v1279 = vpop.xlane.xlu0 %1278
        %v1280 = vadd.f32 %v1200, %v1201
        %1281 = vadd.xlane.f32.xlu0 %v1280
        %v1282 = vpop.xlane.xlu0 %1281
        %v1283 = vadd.f32 %v1202, %v1203
        %1284 = vadd.xlane.f32.xlu0 %v1283
        %v1285 = vpop.xlane.xlu0 %1284
        %v1286 = vadd.f32 %v1204, %v1205
        %1287 = vadd.xlane.f32.xlu0 %v1286
        %v1288 = vpop.xlane.xlu0 %1287
        %v1289 = vadd.f32 %v1206, %v1207
        %1290 = vadd.xlane.f32.xlu0 %v1289
        %v1291 = vpop.xlane.xlu0 %1290
        %v1292 = vadd.f32 %v1208, %v1209
        %1293 = vadd.xlane.f32.xlu0 %v1292
        %v1294 = vpop.xlane.xlu0 %1293
        %v1295 = vadd.f32 %v1210, %v1211
        %1296 = vadd.xlane.f32.xlu0 %v1295
        %v1297 = vpop.xlane.xlu0 %1296
        %v1298 = vadd.f32 %v1212, %v1213
        %1299 = vadd.xlane.f32.xlu0 %v1298
        %v1300 = vpop.xlane.xlu0 %1299
        %v1301 = vadd.f32 %v1214, %v1215
        %1302 = vadd.xlane.f32.xlu0 %v1301
        %v1303 = vpop.xlane.xlu0 %1302
        %v1304 = vadd.f32 %v1216, %v1217
        %1305 = vadd.xlane.f32.xlu0 %v1304
        %v1306 = vpop.xlane.xlu0 %1305
        %v1307 = vadd.f32 %v1218, %v1219
        %1308 = vadd.xlane.f32.xlu0 %v1307
        %v1309 = vpop.xlane.xlu0 %1308
        %v1310 = vadd.f32 %v1220, %v1221
        %1311 = vadd.xlane.f32.xlu0 %v1310
        %v1312 = vpop.xlane.xlu0 %1311
        %v1313 = vadd.f32 %v1222, %v1223
        %1314 = vadd.xlane.f32.xlu0 %v1313
        %v1315 = vpop.xlane.xlu0 %1314
        %v1316 = vadd.f32 %v1224, %v1225
        %1317 = vadd.xlane.f32.xlu0 %v1316
        %v1318 = vpop.xlane.xlu0 %1317
        %v1319 = vadd.f32 %v1226, %v1227
        %1320 = vadd.xlane.f32.xlu0 %v1319
        %v1321 = vpop.xlane.xlu0 %1320
        %v1322 = vadd.f32 %v1228, %v1229
        %1323 = vadd.xlane.f32.xlu0 %v1322
        %v1324 = vpop.xlane.xlu0 %1323
        %v1325 = vadd.f32 %v1230, %v1231
        %1326 = vadd.xlane.f32.xlu0 %v1325
        %v1327 = vpop.xlane.xlu0 %1326
        %v1328 = vld [vmem:[%s326] sm:$0xff]
        %v1329 = vld [vmem:[%s326 + $0x8] sm:$0xff]
        %v1330 = vld [vmem:[%s326 + $0x10] sm:$0xff]
        %v1331 = vld [vmem:[%s326 + $0x18] sm:$0xff]
        %v1332 = vld [vmem:[%s326 + $0x20] sm:$0xff]
        %v1333 = vld [vmem:[%s326 + $0x28] sm:$0xff]
        %v1334 = vld [vmem:[%s326 + $0x30] sm:$0xff]
        %v1335 = vld [vmem:[%s326 + $0x38] sm:$0xff]
        %v1336 = vld [vmem:[%s326 + $0x40] sm:$0xff]
        %v1337 = vld [vmem:[%s326 + $0x48] sm:$0xff]
        %v1338 = vld [vmem:[%s326 + $0x50] sm:$0xff]
        %v1339 = vld [vmem:[%s326 + $0x58] sm:$0xff]
        %v1340 = vld [vmem:[%s326 + $0x60] sm:$0xff]
        %v1341 = vld [vmem:[%s326 + $0x68] sm:$0xff]
        %v1342 = vld [vmem:[%s326 + $0x70] sm:$0xff]
        %v1343 = vld [vmem:[%s326 + $0x78] sm:$0xff]
        %v1344 = vld [vmem:[%s326 + $0x80] sm:$0xff]
        %v1345 = vld [vmem:[%s326 + $0x88] sm:$0xff]
        %v1346 = vld [vmem:[%s326 + $0x90] sm:$0xff]
        %v1347 = vld [vmem:[%s326 + $0x98] sm:$0xff]
        %v1348 = vld [vmem:[%s326 + $0xa0] sm:$0xff]
        %v1349 = vld [vmem:[%s326 + $0xa8] sm:$0xff]
        %v1350 = vld [vmem:[%s326 + $0xb0] sm:$0xff]
        %v1351 = vld [vmem:[%s326 + $0xb8] sm:$0xff]
        %v1352 = vld [vmem:[%s326 + $0xc0] sm:$0xff]
        %v1353 = vld [vmem:[%s326 + $0xc8] sm:$0xff]
        %v1354 = vld [vmem:[%s326 + $0xd0] sm:$0xff]
        %v1355 = vld [vmem:[%s326 + $0xd8] sm:$0xff]
        %v1356 = vld [vmem:[%s326 + $0xe0] sm:$0xff]
        %v1357 = vld [vmem:[%s326 + $0xe8] sm:$0xff]
        %v1358 = vld [vmem:[%s326 + $0xf0] sm:$0xff]
        %v1359 = vld [vmem:[%s326 + $0xf8] sm:$0xff]
        %v1360 = vrsqrt.pop %v1234
        %v1361 = vmul.f32 %v1360, %v1234
        %v1362 = vmul.f32 %v1361, %v1360
        %v1363 = vmul.f32 0.5, %v1362
        %v1364 = vsub.f32 1.5, %v1363
        %v1365 = vmul.f32 %v1360, %v1364
        %vm1366 = vweird.f32 %v1234
        %vm1367 = vweird.f32 %v1360
        %vm1368 = vmor %vm1366, %vm1367
        %v1369 = vsel %vm1368, %v1360, %v1365
        %v1370 = vrsqrt.pop %v1237
        %v1371 = vmul.f32 %v1370, %v1237
        %v1372 = vmul.f32 %v1371, %v1370
        %v1373 = vmul.f32 0.5, %v1372
        %v1374 = vsub.f32 1.5, %v1373
        %v1375 = vmul.f32 %v1370, %v1374
        %vm1376 = vweird.f32 %v1237
        %vm1377 = vweird.f32 %v1370
        %vm1378 = vmor %vm1376, %vm1377
        %v1379 = vsel %vm1378, %v1370, %v1375
        %v1380 = vrsqrt.pop %v1240
        %v1381 = vmul.f32 %v1380, %v1240
        %v1382 = vmul.f32 %v1381, %v1380
        %v1383 = vmul.f32 0.5, %v1382
        %v1384 = vsub.f32 1.5, %v1383
        %v1385 = vmul.f32 %v1380, %v1384
        %vm1386 = vweird.f32 %v1240
        %vm1387 = vweird.f32 %v1380
        %vm1388 = vmor %vm1386, %vm1387
        %v1389 = vsel %vm1388, %v1380, %v1385
        %v1390 = vrsqrt.pop %v1243
        %v1391 = vmul.f32 %v1390, %v1243
        %v1392 = vmul.f32 %v1391, %v1390
        %v1393 = vmul.f32 0.5, %v1392
        %v1394 = vsub.f32 1.5, %v1393
        %v1395 = vmul.f32 %v1390, %v1394
        %vm1396 = vweird.f32 %v1243
        %vm1397 = vweird.f32 %v1390
        %vm1398 = vmor %vm1396, %vm1397
        %v1399 = vsel %vm1398, %v1390, %v1395
        %v1400 = vrsqrt.pop %v1246
        %v1401 = vmul.f32 %v1400, %v1246
        %v1402 = vmul.f32 %v1401, %v1400
        %v1403 = vmul.f32 0.5, %v1402
        %v1404 = vsub.f32 1.5, %v1403
        %v1405 = vmul.f32 %v1400, %v1404
        %vm1406 = vweird.f32 %v1246
        %vm1407 = vweird.f32 %v1400
        %vm1408 = vmor %vm1406, %vm1407
        %v1409 = vsel %vm1408, %v1400, %v1405
        %v1410 = vrsqrt.pop %v1249
        %v1411 = vmul.f32 %v1410, %v1249
        %v1412 = vmul.f32 %v1411, %v1410
        %v1413 = vmul.f32 0.5, %v1412
        %v1414 = vsub.f32 1.5, %v1413
        %v1415 = vmul.f32 %v1410, %v1414
        %vm1416 = vweird.f32 %v1249
        %vm1417 = vweird.f32 %v1410
        %vm1418 = vmor %vm1416, %vm1417
        %v1419 = vsel %vm1418, %v1410, %v1415
        %v1420 = vrsqrt.pop %v1252
        %v1421 = vmul.f32 %v1420, %v1252
        %v1422 = vmul.f32 %v1421, %v1420
        %v1423 = vmul.f32 0.5, %v1422
        %v1424 = vsub.f32 1.5, %v1423
        %v1425 = vmul.f32 %v1420, %v1424
        %vm1426 = vweird.f32 %v1252
        %vm1427 = vweird.f32 %v1420
        %vm1428 = vmor %vm1426, %vm1427
        %v1429 = vsel %vm1428, %v1420, %v1425
        %v1430 = vrsqrt.pop %v1255
        %v1431 = vmul.f32 %v1430, %v1255
        %v1432 = vmul.f32 %v1431, %v1430
        %v1433 = vmul.f32 0.5, %v1432
        %v1434 = vsub.f32 1.5, %v1433
        %v1435 = vmul.f32 %v1430, %v1434
        %vm1436 = vweird.f32 %v1255
        %vm1437 = vweird.f32 %v1430
        %vm1438 = vmor %vm1436, %vm1437
        %v1439 = vsel %vm1438, %v1430, %v1435
        %v1440 = vrsqrt.pop %v1258
        %v1441 = vmul.f32 %v1440, %v1258
        %v1442 = vmul.f32 %v1441, %v1440
        %v1443 = vmul.f32 0.5, %v1442
        %v1444 = vsub.f32 1.5, %v1443
        %v1445 = vmul.f32 %v1440, %v1444
        %vm1446 = vweird.f32 %v1258
        %vm1447 = vweird.f32 %v1440
        %vm1448 = vmor %vm1446, %vm1447
        %v1449 = vsel %vm1448, %v1440, %v1445
        %v1450 = vrsqrt.pop %v1261
        %v1451 = vmul.f32 %v1450, %v1261
        %v1452 = vmul.f32 %v1451, %v1450
        %v1453 = vmul.f32 0.5, %v1452
        %v1454 = vsub.f32 1.5, %v1453
        %v1455 = vmul.f32 %v1450, %v1454
        %vm1456 = vweird.f32 %v1261
        %vm1457 = vweird.f32 %v1450
        %vm1458 = vmor %vm1456, %vm1457
        %v1459 = vsel %vm1458, %v1450, %v1455
        %v1460 = vrsqrt.pop %v1264
        %v1461 = vmul.f32 %v1460, %v1264
        %v1462 = vmul.f32 %v1461, %v1460
        %v1463 = vmul.f32 0.5, %v1462
        %v1464 = vsub.f32 1.5, %v1463
        %v1465 = vmul.f32 %v1460, %v1464
        %vm1466 = vweird.f32 %v1264
        %vm1467 = vweird.f32 %v1460
        %vm1468 = vmor %vm1466, %vm1467
        %v1469 = vsel %vm1468, %v1460, %v1465
        %v1470 = vrsqrt.pop %v1267
        %v1471 = vmul.f32 %v1470, %v1267
        %v1472 = vmul.f32 %v1471, %v1470
        %v1473 = vmul.f32 0.5, %v1472
        %v1474 = vsub.f32 1.5, %v1473
        %v1475 = vmul.f32 %v1470, %v1474
        %vm1476 = vweird.f32 %v1267
        %vm1477 = vweird.f32 %v1470
        %vm1478 = vmor %vm1476, %vm1477
        %v1479 = vsel %vm1478, %v1470, %v1475
        %v1480 = vrsqrt.pop %v1270
        %v1481 = vmul.f32 %v1480, %v1270
        %v1482 = vmul.f32 %v1481, %v1480
        %v1483 = vmul.f32 0.5, %v1482
        %v1484 = vsub.f32 1.5, %v1483
        %v1485 = vmul.f32 %v1480, %v1484
        %vm1486 = vweird.f32 %v1270
        %vm1487 = vweird.f32 %v1480
        %vm1488 = vmor %vm1486, %vm1487
        %v1489 = vsel %vm1488, %v1480, %v1485
        %v1490 = vrsqrt.pop %v1273
        %v1491 = vmul.f32 %v1490, %v1273
        %v1492 = vmul.f32 %v1491, %v1490
        %v1493 = vmul.f32 0.5, %v1492
        %v1494 = vsub.f32 1.5, %v1493
        %v1495 = vmul.f32 %v1490, %v1494
        %vm1496 = vweird.f32 %v1273
        %vm1497 = vweird.f32 %v1490
        %vm1498 = vmor %vm1496, %vm1497
        %v1499 = vsel %vm1498, %v1490, %v1495
        %v1500 = vrsqrt.pop %v1276
        %v1501 = vmul.f32 %v1500, %v1276
        %v1502 = vmul.f32 %v1501, %v1500
        %v1503 = vmul.f32 0.5, %v1502
        %v1504 = vsub.f32 1.5, %v1503
        %v1505 = vmul.f32 %v1500, %v1504
        %vm1506 = vweird.f32 %v1276
        %vm1507 = vweird.f32 %v1500
        %vm1508 = vmor %vm1506, %vm1507
        %v1509 = vsel %vm1508, %v1500, %v1505
        %v1510 = vrsqrt.pop %v1279
        %v1511 = vmul.f32 %v1510, %v1279
        %v1512 = vmul.f32 %v1511, %v1510
        %v1513 = vmul.f32 0.5, %v1512
        %v1514 = vsub.f32 1.5, %v1513
        %v1515 = vmul.f32 %v1510, %v1514
        %vm1516 = vweird.f32 %v1279
        %vm1517 = vweird.f32 %v1510
        %vm1518 = vmor %vm1516, %vm1517
        %v1519 = vsel %vm1518, %v1510, %v1515
        %v1520 = vrsqrt.pop %v1282
        %v1521 = vmul.f32 %v1520, %v1282
        %v1522 = vmul.f32 %v1521, %v1520
        %v1523 = vmul.f32 0.5, %v1522
        %v1524 = vsub.f32 1.5, %v1523
        %v1525 = vmul.f32 %v1520, %v1524
        %vm1526 = vweird.f32 %v1282
        %vm1527 = vweird.f32 %v1520
        %vm1528 = vmor %vm1526, %vm1527
        %v1529 = vsel %vm1528, %v1520, %v1525
        %v1530 = vrsqrt.pop %v1285
        %v1531 = vmul.f32 %v1530, %v1285
        %v1532 = vmul.f32 %v1531, %v1530
        %v1533 = vmul.f32 0.5, %v1532
        %v1534 = vsub.f32 1.5, %v1533
        %v1535 = vmul.f32 %v1530, %v1534
        %vm1536 = vweird.f32 %v1285
        %vm1537 = vweird.f32 %v1530
        %vm1538 = vmor %vm1536, %vm1537
        %v1539 = vsel %vm1538, %v1530, %v1535
        %v1540 = vrsqrt.pop %v1288
        %v1541 = vmul.f32 %v1540, %v1288
        %v1542 = vmul.f32 %v1541, %v1540
        %v1543 = vmul.f32 0.5, %v1542
        %v1544 = vsub.f32 1.5, %v1543
        %v1545 = vmul.f32 %v1540, %v1544
        %vm1546 = vweird.f32 %v1288
        %vm1547 = vweird.f32 %v1540
        %vm1548 = vmor %vm1546, %vm1547
        %v1549 = vsel %vm1548, %v1540, %v1545
        %v1550 = vrsqrt.pop %v1291
        %v1551 = vmul.f32 %v1550, %v1291
        %v1552 = vmul.f32 %v1551, %v1550
        %v1553 = vmul.f32 0.5, %v1552
        %v1554 = vsub.f32 1.5, %v1553
        %v1555 = vmul.f32 %v1550, %v1554
        %vm1556 = vweird.f32 %v1291
        %vm1557 = vweird.f32 %v1550
        %vm1558 = vmor %vm1556, %vm1557
        %v1559 = vsel %vm1558, %v1550, %v1555
        %v1560 = vrsqrt.pop %v1294
        %v1561 = vmul.f32 %v1560, %v1294
        %v1562 = vmul.f32 %v1561, %v1560
        %v1563 = vmul.f32 0.5, %v1562
        %v1564 = vsub.f32 1.5, %v1563
        %v1565 = vmul.f32 %v1560, %v1564
        %vm1566 = vweird.f32 %v1294
        %vm1567 = vweird.f32 %v1560
        %vm1568 = vmor %vm1566, %vm1567
        %v1569 = vsel %vm1568, %v1560, %v1565
        %v1570 = vrsqrt.pop %v1297
        %v1571 = vmul.f32 %v1570, %v1297
        %v1572 = vmul.f32 %v1571, %v1570
        %v1573 = vmul.f32 0.5, %v1572
        %v1574 = vsub.f32 1.5, %v1573
        %v1575 = vmul.f32 %v1570, %v1574
        %vm1576 = vweird.f32 %v1297
        %vm1577 = vweird.f32 %v1570
        %vm1578 = vmor %vm1576, %vm1577
        %v1579 = vsel %vm1578, %v1570, %v1575
        %v1580 = vrsqrt.pop %v1300
        %v1581 = vmul.f32 %v1580, %v1300
        %v1582 = vmul.f32 %v1581, %v1580
        %v1583 = vmul.f32 0.5, %v1582
        %v1584 = vsub.f32 1.5, %v1583
        %v1585 = vmul.f32 %v1580, %v1584
        %vm1586 = vweird.f32 %v1300
        %vm1587 = vweird.f32 %v1580
        %vm1588 = vmor %vm1586, %vm1587
        %v1589 = vsel %vm1588, %v1580, %v1585
        %v1590 = vrsqrt.pop %v1303
        %v1591 = vmul.f32 %v1590, %v1303
        %v1592 = vmul.f32 %v1591, %v1590
        %v1593 = vmul.f32 0.5, %v1592
        %v1594 = vsub.f32 1.5, %v1593
        %v1595 = vmul.f32 %v1590, %v1594
        %vm1596 = vweird.f32 %v1303
        %vm1597 = vweird.f32 %v1590
        %vm1598 = vmor %vm1596, %vm1597
        %v1599 = vsel %vm1598, %v1590, %v1595
        %v1600 = vrsqrt.pop %v1306
        %v1601 = vmul.f32 %v1600, %v1306
        %v1602 = vmul.f32 %v1601, %v1600
        %v1603 = vmul.f32 0.5, %v1602
        %v1604 = vsub.f32 1.5, %v1603
        %v1605 = vmul.f32 %v1600, %v1604
        %vm1606 = vweird.f32 %v1306
        %vm1607 = vweird.f32 %v1600
        %vm1608 = vmor %vm1606, %vm1607
        %v1609 = vsel %vm1608, %v1600, %v1605
        %v1610 = vrsqrt.pop %v1309
        %v1611 = vmul.f32 %v1610, %v1309
        %v1612 = vmul.f32 %v1611, %v1610
        %v1613 = vmul.f32 0.5, %v1612
        %v1614 = vsub.f32 1.5, %v1613
        %v1615 = vmul.f32 %v1610, %v1614
        %vm1616 = vweird.f32 %v1309
        %vm1617 = vweird.f32 %v1610
        %vm1618 = vmor %vm1616, %vm1617
        %v1619 = vsel %vm1618, %v1610, %v1615
        %v1620 = vrsqrt.pop %v1312
        %v1621 = vmul.f32 %v1620, %v1312
        %v1622 = vmul.f32 %v1621, %v1620
        %v1623 = vmul.f32 0.5, %v1622
        %v1624 = vsub.f32 1.5, %v1623
        %v1625 = vmul.f32 %v1620, %v1624
        %vm1626 = vweird.f32 %v1312
        %vm1627 = vweird.f32 %v1620
        %vm1628 = vmor %vm1626, %vm1627
        %v1629 = vsel %vm1628, %v1620, %v1625
        %v1630 = vrsqrt.pop %v1315
        %v1631 = vmul.f32 %v1630, %v1315
        %v1632 = vmul.f32 %v1631, %v1630
        %v1633 = vmul.f32 0.5, %v1632
        %v1634 = vsub.f32 1.5, %v1633
        %v1635 = vmul.f32 %v1630, %v1634
        %vm1636 = vweird.f32 %v1315
        %vm1637 = vweird.f32 %v1630
        %vm1638 = vmor %vm1636, %vm1637
        %v1639 = vsel %vm1638, %v1630, %v1635
        %v1640 = vrsqrt.pop %v1318
        %v1641 = vmul.f32 %v1640, %v1318
        %v1642 = vmul.f32 %v1641, %v1640
        %v1643 = vmul.f32 0.5, %v1642
        %v1644 = vsub.f32 1.5, %v1643
        %v1645 = vmul.f32 %v1640, %v1644
        %vm1646 = vweird.f32 %v1318
        %vm1647 = vweird.f32 %v1640
        %vm1648 = vmor %vm1646, %vm1647
        %v1649 = vsel %vm1648, %v1640, %v1645
        %v1650 = vrsqrt.pop %v1321
        %v1651 = vmul.f32 %v1650, %v1321
        %v1652 = vmul.f32 %v1651, %v1650
        %v1653 = vmul.f32 0.5, %v1652
        %v1654 = vsub.f32 1.5, %v1653
        %v1655 = vmul.f32 %v1650, %v1654
        %vm1656 = vweird.f32 %v1321
        %vm1657 = vweird.f32 %v1650
        %vm1658 = vmor %vm1656, %vm1657
        %v1659 = vsel %vm1658, %v1650, %v1655
        %v1660 = vrsqrt.pop %v1324
        %v1661 = vmul.f32 %v1660, %v1324
        %v1662 = vmul.f32 %v1661, %v1660
        %v1663 = vmul.f32 0.5, %v1662
        %v1664 = vsub.f32 1.5, %v1663
        %v1665 = vmul.f32 %v1660, %v1664
        %vm1666 = vweird.f32 %v1324
        %vm1667 = vweird.f32 %v1660
        %vm1668 = vmor %vm1666, %vm1667
        %v1669 = vsel %vm1668, %v1660, %v1665
        %v1670 = vrsqrt.pop %v1327
        %v1671 = vmul.f32 %v1670, %v1327
        %v1672 = vmul.f32 %v1671, %v1670
        %v1673 = vmul.f32 0.5, %v1672
        %v1674 = vsub.f32 1.5, %v1673
        %v1675 = vmul.f32 %v1670, %v1674
        %vm1676 = vweird.f32 %v1327
        %vm1677 = vweird.f32 %v1670
        %vm1678 = vmor %vm1676, %vm1677
        %v1679 = vsel %vm1678, %v1670, %v1675
        %v1680 = vmul.f32 %v1328, %v1369
        %v1681 = vmul.f32 %v1329, %v1379
        %v1682 = vmul.f32 %v1330, %v1389
        %v1683 = vmul.f32 %v1331, %v1399
        %v1684 = vmul.f32 %v1332, %v1409
        %v1685 = vmul.f32 %v1333, %v1419
        %v1686 = vmul.f32 %v1334, %v1429
        %v1687 = vmul.f32 %v1335, %v1439
        %v1688 = vmul.f32 %v1336, %v1449
        %v1689 = vmul.f32 %v1337, %v1459
        %v1690 = vmul.f32 %v1338, %v1469
        %v1691 = vmul.f32 %v1339, %v1479
        %v1692 = vmul.f32 %v1340, %v1489
        %v1693 = vmul.f32 %v1341, %v1499
        %v1694 = vmul.f32 %v1342, %v1509
        %v1695 = vmul.f32 %v1343, %v1519
        %v1696 = vmul.f32 %v1344, %v1529
        %v1697 = vmul.f32 %v1345, %v1539
        %v1698 = vmul.f32 %v1346, %v1549
        %v1699 = vmul.f32 %v1347, %v1559
        %v1700 = vmul.f32 %v1348, %v1569
        %v1701 = vmul.f32 %v1349, %v1579
        %v1702 = vmul.f32 %v1350, %v1589
        %v1703 = vmul.f32 %v1351, %v1599
        %v1704 = vmul.f32 %v1352, %v1609
        %v1705 = vmul.f32 %v1353, %v1619
        %v1706 = vmul.f32 %v1354, %v1629
        %v1707 = vmul.f32 %v1355, %v1639
        %v1708 = vmul.f32 %v1356, %v1649
        %v1709 = vmul.f32 %v1357, %v1659
        %v1710 = vmul.f32 %v1358, %v1669
        %v1711 = vmul.f32 %v1359, %v1679
        %1713 = vset.pattern.permute.xlu0 0
        %1714 = vperm.xlu0 %1713, %v1680
        %v1715 = vpop.permute.xlu0 %1714
        %1718 = vset.pattern.permute.xlu0 0
        %1719 = vperm.xlu0 %1718, %v1681
        %v1720 = vpop.permute.xlu0 %1719
        %1723 = vset.pattern.permute.xlu0 0
        %1724 = vperm.xlu0 %1723, %v1682
        %v1725 = vpop.permute.xlu0 %1724
        %1728 = vset.pattern.permute.xlu0 0
        %1729 = vperm.xlu0 %1728, %v1683
        %v1730 = vpop.permute.xlu0 %1729
        %1733 = vset.pattern.permute.xlu0 0
        %1734 = vperm.xlu0 %1733, %v1684
        %v1735 = vpop.permute.xlu0 %1734
        %1738 = vset.pattern.permute.xlu0 0
        %1739 = vperm.xlu0 %1738, %v1685
        %v1740 = vpop.permute.xlu0 %1739
        %1743 = vset.pattern.permute.xlu0 0
        %1744 = vperm.xlu0 %1743, %v1686
        %v1745 = vpop.permute.xlu0 %1744
        %1748 = vset.pattern.permute.xlu0 0
        %1749 = vperm.xlu0 %1748, %v1687
        %v1750 = vpop.permute.xlu0 %1749
        %1753 = vset.pattern.permute.xlu0 0
        %1754 = vperm.xlu0 %1753, %v1688
        %v1755 = vpop.permute.xlu0 %1754
        %1758 = vset.pattern.permute.xlu0 0
        %1759 = vperm.xlu0 %1758, %v1689
        %v1760 = vpop.permute.xlu0 %1759
        %1763 = vset.pattern.permute.xlu0 0
        %1764 = vperm.xlu0 %1763, %v1690
        %v1765 = vpop.permute.xlu0 %1764
        %1768 = vset.pattern.permute.xlu0 0
        %1769 = vperm.xlu0 %1768, %v1691
        %v1770 = vpop.permute.xlu0 %1769
        %1773 = vset.pattern.permute.xlu0 0
        %1774 = vperm.xlu0 %1773, %v1692
        %v1775 = vpop.permute.xlu0 %1774
        %1778 = vset.pattern.permute.xlu0 0
        %1779 = vperm.xlu0 %1778, %v1693
        %v1780 = vpop.permute.xlu0 %1779
        %1783 = vset.pattern.permute.xlu0 0
        %1784 = vperm.xlu0 %1783, %v1694
        %v1785 = vpop.permute.xlu0 %1784
        %1788 = vset.pattern.permute.xlu0 0
        %1789 = vperm.xlu0 %1788, %v1695
        %v1790 = vpop.permute.xlu0 %1789
        %1793 = vset.pattern.permute.xlu0 0
        %1794 = vperm.xlu0 %1793, %v1696
        %v1795 = vpop.permute.xlu0 %1794
        %1798 = vset.pattern.permute.xlu0 0
        %1799 = vperm.xlu0 %1798, %v1697
        %v1800 = vpop.permute.xlu0 %1799
        %1803 = vset.pattern.permute.xlu0 0
        %1804 = vperm.xlu0 %1803, %v1698
        %v1805 = vpop.permute.xlu0 %1804
        %1808 = vset.pattern.permute.xlu0 0
        %1809 = vperm.xlu0 %1808, %v1699
        %v1810 = vpop.permute.xlu0 %1809
        %1813 = vset.pattern.permute.xlu0 0
        %1814 = vperm.xlu0 %1813, %v1700
        %v1815 = vpop.permute.xlu0 %1814
        %1818 = vset.pattern.permute.xlu0 0
        %1819 = vperm.xlu0 %1818, %v1701
        %v1820 = vpop.permute.xlu0 %1819
        %1823 = vset.pattern.permute.xlu0 0
        %1824 = vperm.xlu0 %1823, %v1702
        %v1825 = vpop.permute.xlu0 %1824
        %1828 = vset.pattern.permute.xlu0 0
        %1829 = vperm.xlu0 %1828, %v1703
        %v1830 = vpop.permute.xlu0 %1829
        %1833 = vset.pattern.permute.xlu0 0
        %1834 = vperm.xlu0 %1833, %v1704
        %v1835 = vpop.permute.xlu0 %1834
        %1838 = vset.pattern.permute.xlu0 0
        %1839 = vperm.xlu0 %1838, %v1705
        %v1840 = vpop.permute.xlu0 %1839
        %1843 = vset.pattern.permute.xlu0 0
        %1844 = vperm.xlu0 %1843, %v1706
        %v1845 = vpop.permute.xlu0 %1844
        %1848 = vset.pattern.permute.xlu0 0
        %1849 = vperm.xlu0 %1848, %v1707
        %v1850 = vpop.permute.xlu0 %1849
        %1853 = vset.pattern.permute.xlu0 0
        %1854 = vperm.xlu0 %1853, %v1708
        %v1855 = vpop.permute.xlu0 %1854
        %1858 = vset.pattern.permute.xlu0 0
        %1859 = vperm.xlu0 %1858, %v1709
        %v1860 = vpop.permute.xlu0 %1859
        %1863 = vset.pattern.permute.xlu0 0
        %1864 = vperm.xlu0 %1863, %v1710
        %v1865 = vpop.permute.xlu0 %1864
        %1868 = vset.pattern.permute.xlu0 0
        %1869 = vperm.xlu0 %1868, %v1711
        %v1870 = vpop.permute.xlu0 %1869
        %v1872 = vmul.f32 %v1104, %v1715
        %v1873 = vmul.f32 %v1105, %v1715
        %v1874 = vmul.f32 %v1106, %v1720
        %v1875 = vmul.f32 %v1107, %v1720
        %v1876 = vmul.f32 %v1108, %v1725
        %v1877 = vmul.f32 %v1109, %v1725
        %v1878 = vmul.f32 %v1110, %v1730
        %v1879 = vmul.f32 %v1111, %v1730
        %v1880 = vmul.f32 %v1112, %v1735
        %v1881 = vmul.f32 %v1113, %v1735
        %v1882 = vmul.f32 %v1114, %v1740
        %v1883 = vmul.f32 %v1115, %v1740
        %v1884 = vmul.f32 %v1116, %v1745
        %v1885 = vmul.f32 %v1117, %v1745
        %v1886 = vmul.f32 %v1118, %v1750
        %v1887 = vmul.f32 %v1119, %v1750
        %v1888 = vmul.f32 %v1120, %v1755
        %v1889 = vmul.f32 %v1121, %v1755
        %v1890 = vmul.f32 %v1122, %v1760
        %v1891 = vmul.f32 %v1123, %v1760
        %v1892 = vmul.f32 %v1124, %v1765
        %v1893 = vmul.f32 %v1125, %v1765
        %v1894 = vmul.f32 %v1126, %v1770
        %v1895 = vmul.f32 %v1127, %v1770
        %v1896 = vmul.f32 %v1128, %v1775
        %v1897 = vmul.f32 %v1129, %v1775
        %v1898 = vmul.f32 %v1130, %v1780
        %v1899 = vmul.f32 %v1131, %v1780
        %v1900 = vmul.f32 %v1132, %v1785
        %v1901 = vmul.f32 %v1133, %v1785
        %v1902 = vmul.f32 %v1134, %v1790
        %v1903 = vmul.f32 %v1135, %v1790
        %v1904 = vmul.f32 %v1136, %v1795
        %v1905 = vmul.f32 %v1137, %v1795
        %v1906 = vmul.f32 %v1138, %v1800
        %v1907 = vmul.f32 %v1139, %v1800
        %v1908 = vmul.f32 %v1140, %v1805
        %v1909 = vmul.f32 %v1141, %v1805
        %v1910 = vmul.f32 %v1142, %v1810
        %v1911 = vmul.f32 %v1143, %v1810
        %v1912 = vmul.f32 %v1144, %v1815
        %v1913 = vmul.f32 %v1145, %v1815
        %v1914 = vmul.f32 %v1146, %v1820
        %v1915 = vmul.f32 %v1147, %v1820
        %v1916 = vmul.f32 %v1148, %v1825
        %v1917 = vmul.f32 %v1149, %v1825
        %v1918 = vmul.f32 %v1150, %v1830
        %v1919 = vmul.f32 %v1151, %v1830
        %v1920 = vmul.f32 %v1152, %v1835
        %v1921 = vmul.f32 %v1153, %v1835
        %v1922 = vmul.f32 %v1154, %v1840
        %v1923 = vmul.f32 %v1155, %v1840
        %v1924 = vmul.f32 %v1156, %v1845
        %v1925 = vmul.f32 %v1157, %v1845
        %v1926 = vmul.f32 %v1158, %v1850
        %v1927 = vmul.f32 %v1159, %v1850
        %v1928 = vmul.f32 %v1160, %v1855
        %v1929 = vmul.f32 %v1161, %v1855
        %v1930 = vmul.f32 %v1162, %v1860
        %v1931 = vmul.f32 %v1163, %v1860
        %v1932 = vmul.f32 %v1164, %v1865
        %v1933 = vmul.f32 %v1165, %v1865
        %v1934 = vmul.f32 %v1166, %v1870
        %v1935 = vmul.f32 %v1167, %v1870
        %1936 = vst [vmem:[%s315] sm:$0xff] %v1872
        %1937 = vst [vmem:[%s315 + $0x8] sm:$0xff] %v1873
        %1938 = vst [vmem:[%s315 + $0x10] sm:$0xff] %v1874
        %1939 = vst [vmem:[%s315 + $0x18] sm:$0xff] %v1875
        %1940 = vst [vmem:[%s315 + $0x20] sm:$0xff] %v1876
        %1941 = vst [vmem:[%s315 + $0x28] sm:$0xff] %v1877
        %1942 = vst [vmem:[%s315 + $0x30] sm:$0xff] %v1878
        %1943 = vst [vmem:[%s315 + $0x38] sm:$0xff] %v1879
        %1944 = vst [vmem:[%s315 + $0x40] sm:$0xff] %v1880
        %1945 = vst [vmem:[%s315 + $0x48] sm:$0xff] %v1881
        %1946 = vst [vmem:[%s315 + $0x50] sm:$0xff] %v1882
        %1947 = vst [vmem:[%s315 + $0x58] sm:$0xff] %v1883
        %1948 = vst [vmem:[%s315 + $0x60] sm:$0xff] %v1884
        %1949 = vst [vmem:[%s315 + $0x68] sm:$0xff] %v1885
        %1950 = vst [vmem:[%s315 + $0x70] sm:$0xff] %v1886
        %1951 = vst [vmem:[%s315 + $0x78] sm:$0xff] %v1887
        %1952 = vst [vmem:[%s315 + $0x80] sm:$0xff] %v1888
        %1953 = vst [vmem:[%s315 + $0x88] sm:$0xff] %v1889
        %1954 = vst [vmem:[%s315 + $0x90] sm:$0xff] %v1890
        %1955 = vst [vmem:[%s315 + $0x98] sm:$0xff] %v1891
        %1956 = vst [vmem:[%s315 + $0xa0] sm:$0xff] %v1892
        %1957 = vst [vmem:[%s315 + $0xa8] sm:$0xff] %v1893
        %1958 = vst [vmem:[%s315 + $0xb0] sm:$0xff] %v1894
        %1959 = vst [vmem:[%s315 + $0xb8] sm:$0xff] %v1895
        %1960 = vst [vmem:[%s315 + $0xc0] sm:$0xff] %v1896
        %1961 = vst [vmem:[%s315 + $0xc8] sm:$0xff] %v1897
        %1962 = vst [vmem:[%s315 + $0xd0] sm:$0xff] %v1898
        %1963 = vst [vmem:[%s315 + $0xd8] sm:$0xff] %v1899
        %1964 = vst [vmem:[%s315 + $0xe0] sm:$0xff] %v1900
        %1965 = vst [vmem:[%s315 + $0xe8] sm:$0xff] %v1901
        %1966 = vst [vmem:[%s315 + $0xf0] sm:$0xff] %v1902
        %1967 = vst [vmem:[%s315 + $0xf8] sm:$0xff] %v1903
        %1968 = vst [vmem:[%s315 + $0x100] sm:$0xff] %v1904
        %1969 = vst [vmem:[%s315 + $0x108] sm:$0xff] %v1905
        %1970 = vst [vmem:[%s315 + $0x110] sm:$0xff] %v1906
        %1971 = vst [vmem:[%s315 + $0x118] sm:$0xff] %v1907
        %1972 = vst [vmem:[%s315 + $0x120] sm:$0xff] %v1908
        %1973 = vst [vmem:[%s315 + $0x128] sm:$0xff] %v1909
        %1974 = vst [vmem:[%s315 + $0x130] sm:$0xff] %v1910
        %1975 = vst [vmem:[%s315 + $0x138] sm:$0xff] %v1911
        %1976 = vst [vmem:[%s315 + $0x140] sm:$0xff] %v1912
        %1977 = vst [vmem:[%s315 + $0x148] sm:$0xff] %v1913
        %1978 = vst [vmem:[%s315 + $0x150] sm:$0xff] %v1914
        %1979 = vst [vmem:[%s315 + $0x158] sm:$0xff] %v1915
        %1980 = vst [vmem:[%s315 + $0x160] sm:$0xff] %v1916
        %1981 = vst [vmem:[%s315 + $0x168] sm:$0xff] %v1917
        %1982 = vst [vmem:[%s315 + $0x170] sm:$0xff] %v1918
        %1983 = vst [vmem:[%s315 + $0x178] sm:$0xff] %v1919
        %1984 = vst [vmem:[%s315 + $0x180] sm:$0xff] %v1920
        %1985 = vst [vmem:[%s315 + $0x188] sm:$0xff] %v1921
        %1986 = vst [vmem:[%s315 + $0x190] sm:$0xff] %v1922
        %1987 = vst [vmem:[%s315 + $0x198] sm:$0xff] %v1923
        %1988 = vst [vmem:[%s315 + $0x1a0] sm:$0xff] %v1924
        %1989 = vst [vmem:[%s315 + $0x1a8] sm:$0xff] %v1925
        %1990 = vst [vmem:[%s315 + $0x1b0] sm:$0xff] %v1926
        %1991 = vst [vmem:[%s315 + $0x1b8] sm:$0xff] %v1927
        %1992 = vst [vmem:[%s315 + $0x1c0] sm:$0xff] %v1928
        %1993 = vst [vmem:[%s315 + $0x1c8] sm:$0xff] %v1929
        %1994 = vst [vmem:[%s315 + $0x1d0] sm:$0xff] %v1930
        %1995 = vst [vmem:[%s315 + $0x1d8] sm:$0xff] %v1931
        %1996 = vst [vmem:[%s315 + $0x1e0] sm:$0xff] %v1932
        %1997 = vst [vmem:[%s315 + $0x1e8] sm:$0xff] %v1933
        %1998 = vst [vmem:[%s315 + $0x1f0] sm:$0xff] %v1934
        %1999 = vst [vmem:[%s315 + $0x1f8] sm:$0xff] %v1935
        %s2000 = sand.u32 %s208, 1
        %s2001 = scalar_lea.sflag [#allocation3], %s2000
        %s2002 = sand.u32 %s208, 1
        %s2003 = smul.addr %s2002, 512
        %s2004 = scalar_lea.vmem [#allocation2], %s2003
        // Predicated region
        $region53: #{nonlinear_decoder_forward.1} parent=51 // pred_check
          %p2005 = pneg %p218
        $region54: #{nonlinear_decoder_forward.1} parent=51 // pred_check_branch
          %2007 = sbr.rel (%p2005) target = $region56
        $region55: #{nonlinear_decoder_forward.1} parent=51 // pred_region
          %s2008 = smul.u32 32, %s22
          %2010 = vsyncadd %s2001, 0
          %s2011 = smul.addr %s2008, 2
          %s2012 = smul.addr %s2011, 8
          %s2013 = scalar_lea.hbm %s8, %s2012
          %s2014 = sshll.u32 %s2004, 4
          %s2015 = int_to_ptr.vmem [resolvable:$true] %s2014
          %s2016 = sshll.u32 %s2013, 4
          %s2017 = int_to_ptr.hbm [resolvable:$true] %s2016
          %2022 = dma.vmem_to_hbm [thread:$0]  %s2015, 8192, %s2017, %s2001, 256, 256, 16
        $region56: #{nonlinear_decoder_forward.1} parent=51 // pred_fallthru
          _
      $region52: #{nonlinear_decoder_forward.1} parent=5 // pred_fallthru
        _
      %p2023 = scmp.le.s32.totalorder 2, %s17
      // Predicated region
      $region57: #{nonlinear_decoder_forward.1} parent=5 // pred_check
        %p2024 = pneg %p2023
      $region58: #{nonlinear_decoder_forward.1} parent=5 // pred_check_branch
        %2026 = sbr.rel (%p2024) target = $region60
      $region59: #{nonlinear_decoder_forward.1} parent=5 // pred_region
        %s2027 = ssub.s32 %s17, 2
        // Predicated region
        $region61: #{nonlinear_decoder_forward.1} parent=59 // pred_check
          %p2028 = pneg %p224
        $region62: #{nonlinear_decoder_forward.1} parent=59 // pred_check_branch
          %2030 = sbr.rel (%p2028) target = $region64
        $region63: #{nonlinear_decoder_forward.1} parent=59 // pred_region
          %s2031 = sand.u32 %s209, 1
          %s2032 = scalar_lea.sflag [#allocation3], %s2031
          %s2033 = sand.u32 %s209, 1
          %s2034 = smul.addr %s2033, 512
          %s2035 = scalar_lea.vmem [#allocation2], %s2034
          %2037 = dma.done %s2032, 8192
        $region64: #{nonlinear_decoder_forward.1} parent=59 // pred_fallthru
          _
      $region60: #{nonlinear_decoder_forward.1} parent=5 // pred_fallthru
        _
    $region6: #{nonlinear_decoder_forward.1} parent=1 // loop_footer
      %s21 = sadd.s32 1, %s17
    $region7: #{nonlinear_decoder_forward.1} parent=1 // loop_footer_branch
      %16 = sbr.rel target = $region3
    $region8: #{nonlinear_decoder_forward.1} parent=1 // loop_exit
      _
    %2038 = vsyncpa [#allocation3], 1
    %s2039 = scalar_lea.sflag [#allocation3], 1
    %2040 = vsyncpa %s2039, 1

</llo_original>
